<compile_context>
chip_gen: v5e
topology: v5e:2x2
jax: 0.10.0
libtpu: 0.0.40
codegen_flags: <defaults>
</compile_context>

<pallas_src>
import jax
import jax.numpy as jnp
from jax.experimental import pallas as pl
from jax.experimental.pallas import tpu as pltpu


def _csa_kernel(has_hole_ref, bias_ref, flagq_ref, f_ref, fq_ref, out_ref):
    """One (batch, query-row-tile) grid step; lane-dense layout.

    has_hole_ref: (n_qt,) int32 SMEM -- 1 if this query tile contains any hole lane.
    bias_ref:     (1, L)  f32  -- -1e30 on invalid candidate lanes (masked or pad).
    flagq_ref:    (1, TQ) f32  -- 1.0 on masked (hole) query lanes of this tile.
    f_ref:        (C, L)  f32  -- full candidate features of this image (spatial on lanes).
    fq_ref:       (C, TQ) f32  -- this step's query-column tile of the same features.
    out_ref:      (C, TQ) f32  -- shift_masked output tile.
    """
    q = pl.program_id(1)

    @pl.when(has_hole_ref[q] == 0)
    def _():
        # No masked query lanes in this tile: output is zero, skip everything.
        out_ref[...] = jnp.zeros_like(out_ref)

    @pl.when(has_hole_ref[q] != 0)
    def _():
        f = f_ref[...]                                   # (C, L)
        fq = fq_ref[...]                                 # (C, TQ)
        bias = bias_ref[...]                             # (1, L)
        flag_q = flagq_ref[...]                          # (1, TQ)
        L = f.shape[1]

        # L2-normalize spatial columns (rsqrt -> EUP slot, no VALU divide).
        eps = jnp.float32(1e-16)
        fn = f * jax.lax.rsqrt(jnp.maximum(jnp.sum(f * f, axis=0, keepdims=True), eps))
        fnq = fq * jax.lax.rsqrt(jnp.maximum(jnp.sum(fq * fq, axis=0, keepdims=True), eps))

        # Cosine similarity on the MXU: bf16 operands, f32 accumulation.
        cos = jax.lax.dot_general(
            fnq.astype(jnp.bfloat16), fn.astype(jnp.bfloat16),
            (((0,), (0,)), ((), ())), preferred_element_type=jnp.float32,
        )                                                # (TQ, L)

        # Candidate masking folded into one broadcast add (bias from the wrapper).
        scores = cos + bias                              # (TQ, L)

        # First-occurrence argmax over the lane axis (softmax(10*cos) is monotone,
        # so this matches the reference's softmax-argmax).  Iota stays a (1, L) row.
        mx = jnp.max(scores, axis=1, keepdims=True)      # (TQ, 1)
        col_ids = jax.lax.broadcasted_iota(jnp.int32, (1, L), 1)
        best = jnp.min(
            jnp.where(scores >= mx, col_ids, jnp.int32(L)), axis=1, keepdims=True
        )                                                # (TQ, 1)

        # One-hot transition rows for this query tile; "_paste" via f @ trans^T on
        # the MXU, then zero the known (non-masked) query lanes with one VPU multiply.
        trans = (col_ids == best).astype(jnp.float32)    # (TQ, L)
        pasted = jax.lax.dot_general(
            f, trans, (((1,), (1,)), ((), ())), preferred_element_type=jnp.float32,
        )                                                # (C, TQ)
        out_ref[...] = (pasted * flag_q).astype(out_ref.dtype)


def csa_forward(x, flag):
    """CSA_model.forward / CSAFunction.apply.

    x:    (B, C, H, W) float32 feature map (NCHW, as in PyTorch).
    flag: (H, W) or (H*W,) {0,1} mask, 1 = masked (hole) position.
    Returns shift_masked_all with shape (B, C, H, W).
    """
    B, C, H, W = x.shape
    L = H * W

    # Pad the spatial (lane) axis to a multiple of 128 (full-width vst stores and a
    # full MXU N dimension).  Padded lanes are invalid candidates, zeroed on output.
    L_pad = ((L + 127) // 128) * 128
    TQ = 256 if (L_pad % 256 == 0) else 128
    TQ = min(TQ, L_pad)
    n_qt = L_pad // TQ

    # NCHW flattened spatially is already (B, C, L): no transposes needed.
    f = x.reshape(B, C, L).astype(jnp.float32)
    flag01 = flag.reshape(L) != 0                         # True = masked hole

    if L_pad != L:
        f = jnp.pad(f, ((0, 0), (0, 0), (0, L_pad - L)))
        invalid = jnp.concatenate([flag01, jnp.ones((L_pad - L,), dtype=bool)])
        flag01 = jnp.concatenate([flag01, jnp.zeros((L_pad - L,), dtype=bool)])
    else:
        invalid = flag01

    flag_f32 = flag01.astype(jnp.float32).reshape(1, L_pad)   # keep-mask for output
    bias = (invalid.astype(jnp.float32) * jnp.float32(-1e30)).reshape(1, L_pad)
    has_hole = (jnp.sum(flag01.reshape(n_qt, TQ), axis=1) > 0).astype(jnp.int32)

    out = pl.pallas_call(
        _csa_kernel,
        out_shape=jax.ShapeDtypeStruct((B, C, L_pad), jnp.float32),
        grid_spec=pltpu.PrefetchScalarGridSpec(
            num_scalar_prefetch=1,                # has_hole -> SMEM
            grid=(B, n_qt),
            in_specs=[
                pl.BlockSpec((1, L_pad), lambda b, q, hh: (0, 0)),          # bias row
                pl.BlockSpec((1, TQ), lambda b, q, hh: (0, q)),             # flag tile
                pl.BlockSpec((None, C, L_pad), lambda b, q, hh: (b, 0, 0)),  # full features
                pl.BlockSpec((None, C, TQ), lambda b, q, hh: (b, 0, q)),     # query tile
            ],
            out_specs=pl.BlockSpec((None, C, TQ), lambda b, q, hh: (b, 0, q)),
        ),
        compiler_params=pltpu.CompilerParams(
            dimension_semantics=("parallel", "parallel"),   # batch x query tiles
            vmem_limit_bytes=32 * 1024 * 1024,
        ),
    )(has_hole, bias, flag_f32, f, f)

    if L_pad != L:
        out = out[:, :, :L]
    return out.reshape(B, C, H, W)


class CSAModelPallas:
    """Mirror of CSA_model(threshold, fixed_mask, shift_sz, stride, mask_thred, triple_weight).

    Only the shift_sz=1 / stride=1 (pixel-level patch) configuration used by the
    CSA repo is supported; threshold / mask_thred / triple_weight are stored for
    interface parity but do not affect this fixed configuration.  The flag is a
    single (H, W) mask shared across the batch, matching the repo's usage where
    the mask is computed once from the first batch sample.
    """

    def __init__(self, threshold, fixed_mask, shift_sz=1, stride=1,
                 mask_thred=1, triple_weight=1):
        self.threshold = threshold
        self.fixed_mask = fixed_mask
        self.shift_sz = shift_sz
        self.stride = stride
        self.mask_thred = mask_thred
        self.triple_weight = triple_weight
        self.flag = None  # spatial mask flag, set via set_mask()
        self._fwd = jax.jit(csa_forward)

    def set_mask(self, flag_hw):
        self.flag = flag_hw
        return self.flag

    def __call__(self, x):
        assert self.flag is not None, "call set_mask() first"
        return self._fwd(x, self.flag)


if __name__ == "__main__":
    key = jax.random.PRNGKey(0)

    B, C, H, W = 2, 32, 16, 16
    x = jax.random.normal(key, (B, C, H, W), dtype=jnp.float32)

    # Deterministic spatial mask: an 8x8 hole in the center (flag = 1 inside hole).
    flag = jnp.zeros((H, W), dtype=jnp.int32)
    flag = flag.at[4:12, 4:12].set(1)

    model = CSAModelPallas(threshold=5 / 16.0, fixed_mask=1,
                           shift_sz=1, stride=1, mask_thred=1, triple_weight=1)
    model.set_mask(flag)

    out = model(x)
    out = jax.block_until_ready(out)

    assert out.shape == (B, C, H, W)
    print("KERNEL_OK")
</pallas_src>

<mosaic_0001>
module attributes {stable_mosaic.version = 11 : i64} {
  func.func @_csa_kernel(%arg0: i32, %arg1: i32, %arg2: memref<1xi32, #tpu.memory_space<smem>>, %arg3: memref<1x256xf32, #tpu.memory_space<vmem>>, %arg4: memref<1x256xf32, #tpu.memory_space<vmem>>, %arg5: memref<1x32x256xf32, #tpu.memory_space<vmem>>, %arg6: memref<1x32x256xf32, #tpu.memory_space<vmem>>, %arg7: memref<1x32x256xf32, #tpu.memory_space<vmem>>) attributes {dimension_semantics = [#tpu.dimension_semantics<parallel>, #tpu.dimension_semantics<parallel>], iteration_bounds = array<i64: 2, 1>, scalar_prefetch = 1 : i64, scratch_operands = 0 : i64, tpu.core_type = #tpu.core_type<tc>, window_params = [{pipeline_mode = #tpu.pipeline_mode<synchronous>, transform_indices = @transform_0, window_bounds = array<i64: 1, 256>}, {transform_indices = @transform_1, window_bounds = array<i64: 1, 256>}, {transform_indices = @transform_2, window_bounds = array<i64: 1, 32, 256>}, {transform_indices = @transform_3, window_bounds = array<i64: 1, 32, 256>}, {transform_indices = @transform_4, window_bounds = array<i64: 1, 32, 256>}]} {
    %0 = arith.index_cast %arg1 : i32 to index
    %1 = memref.load %arg2[%0] : memref<1xi32, #tpu.memory_space<smem>>
    %c0_i32 = arith.constant 0 : i32
    %2 = arith.cmpi eq, %1, %c0_i32 : i32
    %3 = arith.extui %2 : i1 to i32
    %c0_i32_0 = arith.constant 0 : i32
    %4 = arith.cmpi ne, %3, %c0_i32_0 : i32
    scf.if %4 {
      %cst = arith.constant 0.000000e+00 : f32
      %10 = vector.broadcast %cst : f32 to vector<32x256xf32>
      %c0 = arith.constant 0 : index
      %c0_3 = arith.constant 0 : index
      %c0_4 = arith.constant 0 : index
      %11 = vector.load %arg7[%c0, %c0_3, %c0_4] : memref<1x32x256xf32, #tpu.memory_space<vmem>>, vector<1x32x256xf32>
      %12 = vector.shape_cast %11 : vector<1x32x256xf32> to vector<32x256xf32>
      %13 = vector.shape_cast %10 : vector<32x256xf32> to vector<1x32x256xf32>
      tpu.vector_store %arg7[%c0, %c0_3, %c0_4], %13 {strides = array<i32>} : memref<1x32x256xf32, #tpu.memory_space<vmem>>, vector<1x32x256xf32>,
    } else {
    }
    %5 = arith.index_cast %arg1 : i32 to index
    %6 = memref.load %arg2[%5] : memref<1xi32, #tpu.memory_space<smem>>
    %c0_i32_1 = arith.constant 0 : i32
    %7 = arith.cmpi ne, %6, %c0_i32_1 : i32
    %8 = arith.extui %7 : i1 to i32
    %c0_i32_2 = arith.constant 0 : i32
    %9 = arith.cmpi ne, %8, %c0_i32_2 : i32
    scf.if %9 {
      %c0 = arith.constant 0 : index
      %c0_3 = arith.constant 0 : index
      %c0_4 = arith.constant 0 : index
      %10 = vector.load %arg5[%c0, %c0_3, %c0_4] : memref<1x32x256xf32, #tpu.memory_space<vmem>>, vector<1x32x256xf32>
      %11 = vector.shape_cast %10 : vector<1x32x256xf32> to vector<32x256xf32>
      %c0_5 = arith.constant 0 : index
      %c0_6 = arith.constant 0 : index
      %c0_7 = arith.constant 0 : index
      %12 = vector.load %arg6[%c0_5, %c0_6, %c0_7] : memref<1x32x256xf32, #tpu.memory_space<vmem>>, vector<1x32x256xf32>
      %13 = vector.shape_cast %12 : vector<1x32x256xf32> to vector<32x256xf32>
      %c0_8 = arith.constant 0 : index
      %c0_9 = arith.constant 0 : index
      %14 = vector.load %arg3[%c0_8, %c0_9] : memref<1x256xf32, #tpu.memory_space<vmem>>, vector<1x256xf32>
      %c0_10 = arith.constant 0 : index
      %c0_11 = arith.constant 0 : index
      %15 = vector.load %arg4[%c0_10, %c0_11] : memref<1x256xf32, #tpu.memory_space<vmem>>, vector<1x256xf32>
      %16 = arith.mulf %11, %11 : vector<32x256xf32>
      %cst = arith.constant dense<0.000000e+00> : vector<256xf32>
      %17 = vector.multi_reduction <add>, %16, %cst [0] : vector<32x256xf32> to vector<256xf32>
      %18 = vector.shape_cast %17 : vector<256xf32> to vector<1x256xf32>
      %cst_12 = arith.constant 1.000000e-16 : f32
      %19 = vector.broadcast %cst_12 : f32 to vector<1x256xf32>
      %20 = arith.maximumf %18, %19 : vector<1x256xf32>
      %21 = math.rsqrt %20 : vector<1x256xf32>
      %22 = vector.broadcast %21 : vector<1x256xf32> to vector<32x256xf32>
      %23 = arith.mulf %11, %22 : vector<32x256xf32>
      %24 = arith.mulf %13, %13 : vector<32x256xf32>
      %cst_13 = arith.constant dense<0.000000e+00> : vector<256xf32>
      %25 = vector.multi_reduction <add>, %24, %cst_13 [0] : vector<32x256xf32> to vector<256xf32>
      %26 = vector.shape_cast %25 : vector<256xf32> to vector<1x256xf32>
      %cst_14 = arith.constant 1.000000e-16 : f32
      %27 = vector.broadcast %cst_14 : f32 to vector<1x256xf32>
      %28 = arith.maximumf %26, %27 : vector<1x256xf32>
      %29 = math.rsqrt %28 : vector<1x256xf32>
      %30 = vector.broadcast %29 : vector<1x256xf32> to vector<32x256xf32>
      %31 = arith.mulf %13, %30 : vector<32x256xf32>
      %32 = arith.truncf %31 : vector<32x256xf32> to vector<32x256xbf16>
      %33 = arith.truncf %23 : vector<32x256xf32> to vector<32x256xbf16>
      %cst_15 = arith.constant dense<0.000000e+00> : vector<256x256xf32>
      %34 = tpu.matmul %32, %33, %cst_15 {dimension_numbers = #tpu.dot_dimension_numbers<[0], [0], [1], [1], [0, 1, 1, 1], [], []>} : vector<32x256xbf16>, vector<32x256xbf16>, vector<256x256xf32> -> vector<256x256xf32>
      %35 = vector.broadcast %14 : vector<1x256xf32> to vector<256x256xf32>
      %36 = arith.addf %34, %35 : vector<256x256xf32>
      %cst_16 = arith.constant dense<0xFF800000> : vector<256xf32>
      %37 = vector.multi_reduction <maximumf>, %36, %cst_16 [1] : vector<256x256xf32> to vector<256xf32>
      %38 = vector.shape_cast %37 : vector<256xf32> to vector<256x1xf32>
      %39 = tpu.iota {dimensions = array<i32: 1>} : vector<1x256xi32>
      %40 = vector.broadcast %38 : vector<256x1xf32> to vector<256x256xf32>
      %41 = arith.cmpf oge, %36, %40 : vector<256x256xf32>
      %c256_i32 = arith.constant 256 : i32
      %42 = vector.shape_cast %39 : vector<1x256xi32> to vector<1x256xi32>
      %43 = vector.broadcast %42 : vector<1x256xi32> to vector<256x256xi32>
      %44 = vector.broadcast %c256_i32 : i32 to vector<256x256xi32>
      %45 = arith.select %41, %43, %44 : vector<256x256xi1>, vector<256x256xi32>
      %cst_17 = arith.constant dense<2147483647> : vector<256xi32>
      %46 = vector.multi_reduction <minsi>, %45, %cst_17 [1] : vector<256x256xi32> to vector<256xi32>
      %47 = vector.shape_cast %46 : vector<256xi32> to vector<256x1xi32>
      %48 = vector.broadcast %39 : vector<1x256xi32> to vector<256x256xi32>
      %49 = vector.broadcast %47 : vector<256x1xi32> to vector<256x256xi32>
      %50 = arith.cmpi eq, %48, %49 : vector<256x256xi32>
      %51 = arith.extui %50 : vector<256x256xi1> to vector<256x256xi32>
      %52 = arith.sitofp %51 : vector<256x256xi32> to vector<256x256xf32>
      %cst_18 = arith.constant dense<0.000000e+00> : vector<32x256xf32>
      %53 = tpu.matmul %11, %52, %cst_18 {dimension_numbers = #tpu.dot_dimension_numbers<[1], [1], [0], [0], [0, 0, 1, 0], [], []>} : vector<32x256xf32>, vector<256x256xf32>, vector<32x256xf32> -> vector<32x256xf32>
      %54 = vector.broadcast %15 : vector<1x256xf32> to vector<32x256xf32>
      %55 = arith.mulf %53, %54 : vector<32x256xf32>
      %c0_19 = arith.constant 0 : index
      %c0_20 = arith.constant 0 : index
      %c0_21 = arith.constant 0 : index
      %56 = vector.load %arg7[%c0_19, %c0_20, %c0_21] : memref<1x32x256xf32, #tpu.memory_space<vmem>>, vector<1x32x256xf32>
      %57 = vector.shape_cast %56 : vector<1x32x256xf32> to vector<32x256xf32>
      %58 = vector.shape_cast %55 : vector<32x256xf32> to vector<1x32x256xf32>
      tpu.vector_store %arg7[%c0_19, %c0_20, %c0_21], %58 {strides = array<i32>} : memref<1x32x256xf32, #tpu.memory_space<vmem>>, vector<1x32x256xf32>,
    } else {
    }
    return
  }
  func.func @transform_0(%arg0: i32, %arg1: i32, %arg2: memref<1xi32, #tpu.memory_space<smem>>) -> (i32, i32) {
    %c0_i32 = arith.constant 0 : i32
    %c0_i32_0 = arith.constant 0 : i32
    %c0_i32_1 = arith.constant 0 : i32
    return %c0_i32, %c0_i32_0 : i32, i32
  }
  func.func @transform_1(%arg0: i32, %arg1: i32, %arg2: memref<1xi32, #tpu.memory_space<smem>>) -> (i32, i32) {
    %c0_i32 = arith.constant 0 : i32
    %c0_i32_0 = arith.constant 0 : i32
    return %c0_i32, %arg1 : i32, i32
  }
  func.func @transform_2(%arg0: i32, %arg1: i32, %arg2: memref<1xi32, #tpu.memory_space<smem>>) -> (i32, i32, i32) {
    %c0_i32 = arith.constant 0 : i32
    %c0_i32_0 = arith.constant 0 : i32
    %c0_i32_1 = arith.constant 0 : i32
    return %arg0, %c0_i32, %c0_i32_0 : i32, i32, i32
  }
  func.func @transform_3(%arg0: i32, %arg1: i32, %arg2: memref<1xi32, #tpu.memory_space<smem>>) -> (i32, i32, i32) {
    %c0_i32 = arith.constant 0 : i32
    %c0_i32_0 = arith.constant 0 : i32
    return %arg0, %c0_i32, %arg1 : i32, i32, i32
  }
  func.func @transform_4(%arg0: i32, %arg1: i32, %arg2: memref<1xi32, #tpu.memory_space<smem>>) -> (i32, i32, i32) {
    %c0_i32 = arith.constant 0 : i32
    %c0_i32_0 = arith.constant 0 : i32
    return %arg0, %c0_i32, %arg1 : i32, i32, i32
  }
}

</mosaic_0001>

<llo_original>
// kernel: csa_forward.1
$region0: #{csa_forward.1}
  #allocation0 [shape = 'u32[]', space=smem, size = 0x4, offset = 0x4, fixed_abs, tag = 'smem constant byte address 0x4 - core index']
  #allocation1 [shape = 'u32[72,128]{1,0:T(1,128)}', space=vmem, size = 0x9000, scoped, tag = 'internal scratch']
  #allocation2 [shape = 's32[1]{0}', space=sflag, size = 0x4, scoped, tag = 'scoped memory for csa_forward.1']
  #allocation3 [shape = 's32[1]{0:T(128)S(6)}', space=smem, size = 0x200, scoped, tag = 'prefetched SMEM operand 0']
  %s0 = inlined_call_operand.<no memory space> [shape: s32[1], index: 0, kind: input, shape index: {}]
  %s1 = inlined_call_operand.vmem [shape: f32[1,256], index: 1, kind: input, shape index: {}]
  %s2 = inlined_call_operand.vmem [shape: f32[1,256], index: 2, kind: input, shape index: {}]
  %s3 = inlined_call_operand.vmem [shape: f32[2,32,256], index: 3, kind: input, shape index: {}, may-alias: {3,4}]
  %s4 = inlined_call_operand.vmem [shape: f32[2,32,256], index: 4, kind: input, shape index: {}, may-alias: {3,4}]
  %s5 = inlined_call_operand.vmem [shape: f32[2,32,256], index: 5, kind: output, shape index: {}]
  %s6 = sld [smem:[#allocation0]]
  $region57: #{csa_forward.1} parent=0
    _
  %s8 = ssub.s32 1, %s6
  %s9 = scalar_select 0, %s8, %s6
  %10 = sst [smem:[#allocation3]] %s0
  loop: start=0, step=1, limit=4
  $region2: #{csa_forward.1} parent=0 // loop_pre_header
    _
  $region3: #{csa_forward.1} parent=0 // loop_header
    %s12 = sphi 0, %s16
    %p13 = scmp.ge.s32.totalorder %s12, 4
    %s19 = sphi 0, %s31
    %s20 = sphi 0, %s27
    %s21 = sphi 0, %s19
    %s22 = sphi 0, %s20
    %s23 = sphi 0, %s21
    %s24 = sphi 0, %s22
    %s32 = sphi 0, %s32
    %s34 = sphi 0, %s32
    %s35 = sphi 0, %s34
    %s49 = sphi 0, %s35
    %s55 = sphi 0, %s57
    %s58 = sphi 0, %s55
    %s59 = sphi 0, %s58
    %s75 = sphi 0, %s59
    %s81 = sphi 0, %s83
    %s84 = sphi 0, %s81
    %s85 = sphi 0, %s84
    %s101 = sphi 0, %s85
    %s109 = sphi 0, %s111
    %s112 = sphi 0, %s109
    %s113 = sphi 0, %s112
    %s129 = sphi 0, %s113
    %s137 = sphi 0, %s139
    %s140 = sphi 0, %s137
    %s141 = sphi 0, %s140
    %s157 = sphi 0, %s141
  $region4: #{csa_forward.1} parent=0 // loop_header_branch
    %15 = sbr.rel (%p13) target = $region8
  $region5: #{csa_forward.1} parent=0 // loop_body
    %s17 = ssub.s32 %s12, 1
    %s18 = ssub.s32 %s12, 2
    %s25 = sadd.s32 1, %s20
    %p26 = scmp.ge.s32.totalorder %s25, 1
    %s27 = scalar_select %p26, 0, %s25
    %s28 = sadd.s32 1, %s19
    %s29 = scalar_select %p26, %s28, %s19
    %p30 = scmp.ge.s32.totalorder %s29, 2
    %s31 = scalar_select %p30, 0, %s29
    %s33 = sadd.s32 %s32, 1
    %p36 = scmp.eq.s32.totalorder %s12, 1
    %p37 = scmp.ne.s32.totalorder %s32, %s34
    %p38 = scmp.eq.s32.totalorder %s12, 0
    %p39 = por %p37, %p38
    %p40 = scmp.ne.s32.totalorder %s32, %s34
    %p41 = scmp.eq.s32.totalorder %s17, 1
    %p42 = por %p40, %p41
    %p43 = scmp.ne.s32.totalorder %s34, %s35
    %p44 = scmp.eq.s32.totalorder %s17, 0
    %p45 = por %p43, %p44
    %p46 = scmp.ne.s32.totalorder %s34, %s35
    %p47 = scmp.eq.s32.totalorder %s18, 1
    %p48 = por %p46, %p47
    %p50 = scmp.ne.s32.totalorder %s35, %s49
    %p51 = scmp.eq.s32.totalorder %s18, 0
    %p52 = por %p50, %p51
    %s53 = ssub.s32 %s20, %s27
    %p54 = scmp.eq.s32.totalorder %s53, 0
    %s56 = sadd.s32 %s55, 1
    %s57 = scalar_select %p54, %s55, %s56
    %p60 = pneg %p54
    %p61 = scmp.eq.s32.totalorder %s12, 1
    %p62 = por %p60, %p61
    %p63 = scmp.ne.s32.totalorder %s55, %s58
    %p64 = scmp.eq.s32.totalorder %s12, 0
    %p65 = por %p63, %p64
    %p66 = scmp.ne.s32.totalorder %s55, %s58
    %p67 = scmp.eq.s32.totalorder %s17, 1
    %p68 = por %p66, %p67
    %p69 = scmp.ne.s32.totalorder %s58, %s59
    %p70 = scmp.eq.s32.totalorder %s17, 0
    %p71 = por %p69, %p70
    %p72 = scmp.ne.s32.totalorder %s58, %s59
    %p73 = scmp.eq.s32.totalorder %s18, 1
    %p74 = por %p72, %p73
    %p76 = scmp.ne.s32.totalorder %s59, %s75
    %p77 = scmp.eq.s32.totalorder %s18, 0
    %p78 = por %p76, %p77
    %s79 = ssub.s32 %s19, %s31
    %p80 = scmp.eq.s32.totalorder %s79, 0
    %s82 = sadd.s32 %s81, 1
    %s83 = scalar_select %p80, %s81, %s82
    %p86 = pneg %p80
    %p87 = scmp.eq.s32.totalorder %s12, 1
    %p88 = por %p86, %p87
    %p89 = scmp.ne.s32.totalorder %s81, %s84
    %p90 = scmp.eq.s32.totalorder %s12, 0
    %p91 = por %p89, %p90
    %p92 = scmp.ne.s32.totalorder %s81, %s84
    %p93 = scmp.eq.s32.totalorder %s17, 1
    %p94 = por %p92, %p93
    %p95 = scmp.ne.s32.totalorder %s84, %s85
    %p96 = scmp.eq.s32.totalorder %s17, 0
    %p97 = por %p95, %p96
    %p98 = scmp.ne.s32.totalorder %s84, %s85
    %p99 = scmp.eq.s32.totalorder %s18, 1
    %p100 = por %p98, %p99
    %p102 = scmp.ne.s32.totalorder %s85, %s101
    %p103 = scmp.eq.s32.totalorder %s18, 0
    %p104 = por %p102, %p103
    %s105 = ssub.s32 %s19, %s31
    %s106 = ssub.s32 %s20, %s27
    %s107 = sor.u32 %s105, %s106
    %p108 = scmp.eq.s32.totalorder %s107, 0
    %s110 = sadd.s32 %s109, 1
    %s111 = scalar_select %p108, %s109, %s110
    %p114 = pneg %p108
    %p115 = scmp.eq.s32.totalorder %s12, 1
    %p116 = por %p114, %p115
    %p117 = scmp.ne.s32.totalorder %s109, %s112
    %p118 = scmp.eq.s32.totalorder %s12, 0
    %p119 = por %p117, %p118
    %p120 = scmp.ne.s32.totalorder %s109, %s112
    %p121 = scmp.eq.s32.totalorder %s17, 1
    %p122 = por %p120, %p121
    %p123 = scmp.ne.s32.totalorder %s112, %s113
    %p124 = scmp.eq.s32.totalorder %s17, 0
    %p125 = por %p123, %p124
    %p126 = scmp.ne.s32.totalorder %s112, %s113
    %p127 = scmp.eq.s32.totalorder %s18, 1
    %p128 = por %p126, %p127
    %p130 = scmp.ne.s32.totalorder %s113, %s129
    %p131 = scmp.eq.s32.totalorder %s18, 0
    %p132 = por %p130, %p131
    %s133 = ssub.s32 %s19, %s31
    %s134 = ssub.s32 %s20, %s27
    %s135 = sor.u32 %s133, %s134
    %p136 = scmp.eq.s32.totalorder %s135, 0
    %s138 = sadd.s32 %s137, 1
    %s139 = scalar_select %p136, %s137, %s138
    %p142 = pneg %p136
    %p143 = scmp.eq.s32.totalorder %s12, 1
    %p144 = por %p142, %p143
    %p145 = scmp.ne.s32.totalorder %s137, %s140
    %p146 = scmp.eq.s32.totalorder %s12, 0
    %p147 = por %p145, %p146
    %p148 = scmp.ne.s32.totalorder %s137, %s140
    %p149 = scmp.eq.s32.totalorder %s17, 1
    %p150 = por %p148, %p149
    %p151 = scmp.ne.s32.totalorder %s140, %s141
    %p152 = scmp.eq.s32.totalorder %s17, 0
    %p153 = por %p151, %p152
    %p154 = scmp.ne.s32.totalorder %s140, %s141
    %p155 = scmp.eq.s32.totalorder %s18, 1
    %p156 = por %p154, %p155
    %p158 = scmp.ne.s32.totalorder %s141, %s157
    %p159 = scmp.eq.s32.totalorder %s18, 0
    %p160 = por %p158, %p159
    %p161 = scmp.le.s32.totalorder 1, %s12
    %p162 = scmp.lt.s32.totalorder %s12, 3
    %p163 = pnand %p161, %p162
    %p164 = pneg %p163
    // Predicated region
    $region9: #{csa_forward.1} parent=5 // pred_check
      _
    $region10: #{csa_forward.1} parent=5 // pred_check_branch
      %166 = sbr.rel (%p163) target = $region12
    $region11: #{csa_forward.1} parent=5 // pred_region
      %s167 = ssub.s32 %s12, 1
      // Predicated region
      $region13: #{csa_forward.1} parent=11 // pred_check
        %p168 = pneg %p45
      $region14: #{csa_forward.1} parent=11 // pred_check_branch
        %170 = sbr.rel (%p168) target = $region16
      $region15: #{csa_forward.1} parent=11 // pred_region
        _
      $region16: #{csa_forward.1} parent=11 // pred_fallthru
        _
      // Predicated region
      $region17: #{csa_forward.1} parent=11 // pred_check
        %p171 = pneg %p71
      $region18: #{csa_forward.1} parent=11 // pred_check_branch
        %173 = sbr.rel (%p171) target = $region20
      $region19: #{csa_forward.1} parent=11 // pred_region
        %s174 = smul.u32 2, %s22
        %p175 = scmp.lt.s32.totalorder %s174, 1
        %s176 = scalar_select %p175, %s174, 1
        %s177 = scalar_lea.vmem %s2, %s176
        %s178 = smul.u32 2, %s22
      $region20: #{csa_forward.1} parent=11 // pred_fallthru
        _
    $region12: #{csa_forward.1} parent=5 // pred_fallthru
      _
    %p179 = scmp.lt.s32.totalorder %s12, 2
    // Predicated region
    $region21: #{csa_forward.1} parent=5 // pred_check
      %p180 = pneg %p179
    $region22: #{csa_forward.1} parent=5 // pred_check_branch
      %182 = sbr.rel (%p180) target = $region24
    $region23: #{csa_forward.1} parent=5 // pred_region
      // Predicated region
      $region25: #{csa_forward.1} parent=23 // pred_check
        %p183 = pneg %p91
      $region26: #{csa_forward.1} parent=23 // pred_check_branch
        %185 = sbr.rel (%p183) target = $region28
      $region27: #{csa_forward.1} parent=23 // pred_region
        %p186 = scmp.lt.s32.totalorder %s19, 1
        %s187 = scalar_select %p186, %s19, 1
        %s188 = smul.addr %s187, 8
        %s189 = smul.addr %s188, 8
        %s190 = scalar_lea.vmem %s3, %s189
      $region28: #{csa_forward.1} parent=23 // pred_fallthru
        _
      // Predicated region
      $region29: #{csa_forward.1} parent=23 // pred_check
        %p191 = pneg %p119
      $region30: #{csa_forward.1} parent=23 // pred_check_branch
        %193 = sbr.rel (%p191) target = $region32
      $region31: #{csa_forward.1} parent=23 // pred_region
        %s194 = smul.u32 2, %s20
        %p195 = scmp.lt.s32.totalorder %s19, 1
        %s196 = scalar_select %p195, %s19, 1
        %p197 = scmp.lt.s32.totalorder %s194, 1
        %s198 = scalar_select %p197, %s194, 1
        %s199 = smul.addr %s196, 8
        %s200 = sadd.s32 %s198, %s199
        %s201 = smul.addr %s200, 8
        %s202 = scalar_lea.vmem %s4, %s201
        %s203 = smul.u32 2, %s20
      $region32: #{csa_forward.1} parent=23 // pred_fallthru
        _
    $region24: #{csa_forward.1} parent=5 // pred_fallthru
      _
    %p204 = scmp.le.s32.totalorder 1, %s12
    %p205 = scmp.lt.s32.totalorder %s12, 3
    %p206 = pnand %p204, %p205
    %p207 = pneg %p206
    // Predicated region
    $region33: #{csa_forward.1} parent=5 // pred_check
      _
    $region34: #{csa_forward.1} parent=5 // pred_check_branch
      %209 = sbr.rel (%p206) target = $region36
    $region35: #{csa_forward.1} parent=5 // pred_region
      %s210 = ssub.s32 %s12, 1
      %p211 = pneg %p45
      %p212 = pneg %p42
      %s213 = smul.u32 2, %s22
      %p214 = scmp.lt.s32.totalorder %s213, 1
      %s215 = scalar_select %p214, %s213, 1
      %s216 = scalar_lea.vmem %s2, %s215
      %p217 = pneg %p71
      %p218 = pneg %p68
      %p219 = scmp.lt.s32.totalorder %s21, 1
      %s220 = scalar_select %p219, %s21, 1
      %s221 = smul.addr %s220, 8
      %s222 = smul.addr %s221, 8
      %s223 = scalar_lea.vmem %s3, %s222
      %p224 = pneg %p97
      %p225 = pneg %p94
      %s226 = smul.u32 2, %s22
      %p227 = scmp.lt.s32.totalorder %s21, 1
      %s228 = scalar_select %p227, %s21, 1
      %p229 = scmp.lt.s32.totalorder %s226, 1
      %s230 = scalar_select %p229, %s226, 1
      %s231 = smul.addr %s228, 8
      %s232 = sadd.s32 %s230, %s231
      %s233 = smul.addr %s232, 8
      %s234 = scalar_lea.vmem %s4, %s233
      %p235 = pneg %p125
      %p236 = pneg %p122
      %p237 = pneg %p153
      %p238 = pneg %p150
      %s239 = smul.u32 2, %s22
      %p240 = scmp.lt.s32.totalorder %s21, 1
      %s241 = scalar_select %p240, %s21, 1
      %p242 = scmp.lt.s32.totalorder %s239, 1
      %s243 = scalar_select %p242, %s239, 1
      %s244 = smul.addr %s241, 8
      %s245 = sadd.s32 %s243, %s244
      %s246 = smul.addr %s245, 8
      %s247 = scalar_lea.vmem %s5, %s246
      %s248 = smul.u32 2, %s22
      %p249 = scmp.lt.s32.totalorder %s248, 1
      %s250 = scalar_select %p249, %s248, 1
      %s251 = scalar_lea.vmem %s2, %s250
      %s252 = smul.u32 2, %s22
      %p253 = scmp.lt.s32.totalorder %s21, 1
      %s254 = scalar_select %p253, %s21, 1
      %s255 = smul.addr %s254, 8
      %s256 = smul.addr %s255, 8
      %s257 = scalar_lea.vmem %s3, %s256
      %s258 = smul.u32 2, %s22
      %p259 = scmp.lt.s32.totalorder %s21, 1
      %s260 = scalar_select %p259, %s21, 1
      %p261 = scmp.lt.s32.totalorder %s258, 1
      %s262 = scalar_select %p261, %s258, 1
      %s263 = smul.addr %s260, 8
      %s264 = sadd.s32 %s262, %s263
      %s265 = smul.addr %s264, 8
      %s266 = scalar_lea.vmem %s4, %s265
      %s267 = smul.u32 2, %s22
      %s268 = smul.u32 2, %s22
      %p269 = scmp.lt.s32.totalorder %s21, 1
      %s270 = scalar_select %p269, %s21, 1
      %p271 = scmp.lt.s32.totalorder %s268, 1
      %s272 = scalar_select %p271, %s268, 1
      %s273 = smul.addr %s270, 8
      %s274 = sadd.s32 %s272, %s273
      %s275 = smul.addr %s274, 8
      %s276 = scalar_lea.vmem %s5, %s275
      %s277 = smul.u32 2, %s22
      %s279 = sld [smem:[#allocation3 + %s22]]
      %p280 = scmp.eq.s32.totalorder %s279, 0
      // Predicated region
      $region37: #{csa_forward.1} parent=35 // pred_check
        %p281 = pneg %p280
      $region38: #{csa_forward.1} parent=35 // pred_check_branch
        %283 = sbr.rel (%p281) target = $region40
      $region39: #{csa_forward.1} parent=35 // pred_region
        %284 = vst [vmem:[%s276] sm:$0xff] 0.0
        %285 = vst [vmem:[%s276 + $0x8] sm:$0xff] 0.0
        %286 = vst [vmem:[%s276 + $0x10] sm:$0xff] 0.0
        %287 = vst [vmem:[%s276 + $0x18] sm:$0xff] 0.0
        %288 = vst [vmem:[%s276 + $0x20] sm:$0xff] 0.0
        %289 = vst [vmem:[%s276 + $0x28] sm:$0xff] 0.0
        %290 = vst [vmem:[%s276 + $0x30] sm:$0xff] 0.0
        %291 = vst [vmem:[%s276 + $0x38] sm:$0xff] 0.0
      $region40: #{csa_forward.1} parent=35 // pred_fallthru
        _
      %s292 = sld [smem:[#allocation3 + %s22]]
      %p293 = scmp.ne.s32.totalorder %s292, 0
      // Predicated region
      $region41: #{csa_forward.1} parent=35 // pred_check
        %p294 = pneg %p293
      $region42: #{csa_forward.1} parent=35 // pred_check_branch
        %296 = sbr.rel (%p294) target = $region44
      $region43: #{csa_forward.1} parent=35 // pred_region
        %v297 = vld [vmem:[%s257] sm:$0xff]
        %v298 = vld [vmem:[%s257 + $0x8] sm:$0xff]
        %v299 = vld [vmem:[%s257 + $0x10] sm:$0xff]
        %v300 = vld [vmem:[%s257 + $0x18] sm:$0xff]
        %v301 = vld [vmem:[%s257 + $0x20] sm:$0xff]
        %v302 = vld [vmem:[%s257 + $0x28] sm:$0xff]
        %v303 = vld [vmem:[%s257 + $0x30] sm:$0xff]
        %v304 = vld [vmem:[%s257 + $0x38] sm:$0xff]
        %v305 = vld [vmem:[%s266] sm:$0xff]
        %v306 = vld [vmem:[%s266 + $0x8] sm:$0xff]
        %v307 = vld [vmem:[%s266 + $0x10] sm:$0xff]
        %v308 = vld [vmem:[%s266 + $0x18] sm:$0xff]
        %v309 = vld [vmem:[%s266 + $0x20] sm:$0xff]
        %v310 = vld [vmem:[%s266 + $0x28] sm:$0xff]
        %v311 = vld [vmem:[%s266 + $0x30] sm:$0xff]
        %v312 = vld [vmem:[%s266 + $0x38] sm:$0xff]
        %v313 = vld [vmem:[%s1] sm:$0x3]
        %v314 = vld [vmem:[%s251] sm:$0x3]
        %v315 = vmul.f32 %v297, %v297
        %v316 = vmul.f32 %v298, %v298
        %v317 = vmul.f32 %v299, %v299
        %v318 = vmul.f32 %v300, %v300
        %v319 = vmul.f32 %v301, %v301
        %v320 = vmul.f32 %v302, %v302
        %v321 = vmul.f32 %v303, %v303
        %v322 = vmul.f32 %v304, %v304
        %v323 = vadd.f32 %v315, %v317
        %v324 = vadd.f32 %v323, %v319
        %v325 = vadd.f32 %v324, %v321
        %v326 = vrot.slane %v325, 4
        %v327 = vadd.f32 %v325, %v326
        %v328 = vrot.slane %v327, 2
        %v329 = vadd.f32 %v327, %v328
        %v330 = vrot.slane %v329, 1
        %v331 = vadd.f32 %v329, %v330
        %v332 = vadd.f32 %v316, %v318
        %v333 = vadd.f32 %v332, %v320
        %v334 = vadd.f32 %v333, %v322
        %v335 = vrot.slane %v334, 4
        %v336 = vadd.f32 %v334, %v335
        %v337 = vrot.slane %v336, 2
        %v338 = vadd.f32 %v336, %v337
        %v339 = vrot.slane %v338, 1
        %v340 = vadd.f32 %v338, %v339
        %v341 = vmax.f32 %v331, 1e-16
        %v342 = vmax.f32 %v340, 1e-16
        %v343 = vrsqrt.pop %v341
        %v344 = vmul.f32 %v343, %v341
        %v345 = vmul.f32 %v344, %v343
        %v346 = vmul.f32 0.5, %v345
        %v347 = vsub.f32 1.5, %v346
        %v348 = vmul.f32 %v343, %v347
        %vm349 = vweird.f32 %v341
        %vm350 = vweird.f32 %v343
        %vm351 = vmor %vm349, %vm350
        %v352 = vsel %vm351, %v343, %v348
        %v353 = vrsqrt.pop %v342
        %v354 = vmul.f32 %v353, %v342
        %v355 = vmul.f32 %v354, %v353
        %v356 = vmul.f32 0.5, %v355
        %v357 = vsub.f32 1.5, %v356
        %v358 = vmul.f32 %v353, %v357
        %vm359 = vweird.f32 %v342
        %vm360 = vweird.f32 %v353
        %vm361 = vmor %vm359, %vm360
        %v362 = vsel %vm361, %v353, %v358
        %v363 = vmul.f32 %v297, %v352
        %v364 = vmul.f32 %v298, %v362
        %v365 = vmul.f32 %v299, %v352
        %v366 = vmul.f32 %v300, %v362
        %v367 = vmul.f32 %v301, %v352
        %v368 = vmul.f32 %v302, %v362
        %v369 = vmul.f32 %v303, %v352
        %v370 = vmul.f32 %v304, %v362
        %v371 = vmul.f32 %v305, %v305
        %v372 = vmul.f32 %v306, %v306
        %v373 = vmul.f32 %v307, %v307
        %v374 = vmul.f32 %v308, %v308
        %v375 = vmul.f32 %v309, %v309
        %v376 = vmul.f32 %v310, %v310
        %v377 = vmul.f32 %v311, %v311
        %v378 = vmul.f32 %v312, %v312
        %v379 = vadd.f32 %v371, %v373
        %v380 = vadd.f32 %v379, %v375
        %v381 = vadd.f32 %v380, %v377
        %v382 = vrot.slane %v381, 4
        %v383 = vadd.f32 %v381, %v382
        %v384 = vrot.slane %v383, 2
        %v385 = vadd.f32 %v383, %v384
        %v386 = vrot.slane %v385, 1
        %v387 = vadd.f32 %v385, %v386
        %v388 = vadd.f32 %v372, %v374
        %v389 = vadd.f32 %v388, %v376
        %v390 = vadd.f32 %v389, %v378
        %v391 = vrot.slane %v390, 4
        %v392 = vadd.f32 %v390, %v391
        %v393 = vrot.slane %v392, 2
        %v394 = vadd.f32 %v392, %v393
        %v395 = vrot.slane %v394, 1
        %v396 = vadd.f32 %v394, %v395
        %v397 = vmax.f32 %v387, 1e-16
        %v398 = vmax.f32 %v396, 1e-16
        %v399 = vrsqrt.pop %v397
        %v400 = vmul.f32 %v399, %v397
        %v401 = vmul.f32 %v400, %v399
        %v402 = vmul.f32 0.5, %v401
        %v403 = vsub.f32 1.5, %v402
        %v404 = vmul.f32 %v399, %v403
        %vm405 = vweird.f32 %v397
        %vm406 = vweird.f32 %v399
        %vm407 = vmor %vm405, %vm406
        %v408 = vsel %vm407, %v399, %v404
        %v409 = vrsqrt.pop %v398
        %v410 = vmul.f32 %v409, %v398
        %v411 = vmul.f32 %v410, %v409
        %v412 = vmul.f32 0.5, %v411
        %v413 = vsub.f32 1.5, %v412
        %v414 = vmul.f32 %v409, %v413
        %vm415 = vweird.f32 %v398
        %vm416 = vweird.f32 %v409
        %vm417 = vmor %vm415, %vm416
        %v418 = vsel %vm417, %v409, %v414
        %v419 = vmul.f32 %v305, %v408
        %v420 = vmul.f32 %v306, %v418
        %v421 = vmul.f32 %v307, %v408
        %v422 = vmul.f32 %v308, %v418
        %v423 = vmul.f32 %v309, %v408
        %v424 = vmul.f32 %v310, %v418
        %v425 = vmul.f32 %v311, %v408
        %v426 = vmul.f32 %v312, %v418
        %v427 = vpack.c.bf16 %v421, %v419
        %v428 = vpack.c.bf16 %v422, %v420
        %v429 = vpack.c.bf16 %v425, %v423
        %v430 = vpack.c.bf16 %v426, %v424
        %v431 = vpack.c.bf16 %v365, %v363
        %v432 = vpack.c.bf16 %v366, %v364
        %v433 = vpack.c.bf16 %v369, %v367
        %v434 = vpack.c.bf16 %v370, %v368
        %v436 = vperm.slane %v313, 0
        %v437 = vperm.slane %v313, 1
        %440 = vxpose.binary.xlu0.c.b16.start [1/16] %v428, %v427, 128
        %441 = vxpose.binary.xlu0.c.b16.cont [2/16] %v430, %v429, 128
        %442 = vxpose.binary.xlu0.c.b16.cont [3/16] 0, 0, 128
        %443 = vxpose.binary.xlu0.c.b16.cont [4/16] 0, 0, 128
        %444 = vxpose.binary.xlu0.c.b16.cont [5/16] 0, 0, 128
        %445 = vxpose.binary.xlu0.c.b16.cont [6/16] 0, 0, 128
        %446 = vxpose.binary.xlu0.c.b16.cont [7/16] 0, 0, 128
        %447 = vxpose.binary.xlu0.c.b16.end [8/16] 0, 0, 128
        %v448 = vpop.trf.xlu0
        %v449 = vpop.trf.xlu0
        %v450 = vpop.trf.xlu0
        %v451 = vpop.trf.xlu0
        %v452 = vpop.trf.xlu0
        %v453 = vpop.trf.xlu0
        %v454 = vpop.trf.xlu0
        %v455 = vpop.trf.xlu0
        %v456 = vpop.trf.xlu0
        %v457 = vpop.trf.xlu0
        %v458 = vpop.trf.xlu0
        %v459 = vpop.trf.xlu0
        %v460 = vpop.trf.xlu0
        %v461 = vpop.trf.xlu0
        %v462 = vpop.trf.xlu0
        %v463 = vpop.trf.xlu0
        %vm464 = vcmask 261120
        %v466 = vsel %vm464, %v448, 0
        %v469 = vsel %vm464, %v450, 0
        %v472 = vsel %vm464, %v452, 0
        %v475 = vsel %vm464, %v454, 0
        %v478 = vsel %vm464, %v456, 0
        %v481 = vsel %vm464, %v458, 0
        %v484 = vsel %vm464, %v460, 0
        %v487 = vsel %vm464, %v462, 0
        %v490 = vsel %vm464, %v449, 0
        %v493 = vsel %vm464, %v451, 0
        %v496 = vsel %vm464, %v453, 0
        %v499 = vsel %vm464, %v455, 0
        %v502 = vsel %vm464, %v457, 0
        %v505 = vsel %vm464, %v459, 0
        %v508 = vsel %vm464, %v461, 0
        %v511 = vsel %vm464, %v463, 0
        %513 = vmatpush.bf16.msra.mxu0 0
        %514 = vmatpush.bf16.msra.mxu0 0
        %515 = vmatpush.bf16.msra.mxu0 0
        %516 = vmatpush.bf16.msra.mxu0 0
        %517 = vmatpush.bf16.msra.mxu0 0
        %518 = vmatpush.bf16.msra.mxu0 0
        %519 = vmatpush.bf16.msra.mxu0 %v433
        %520 = vmatpush.bf16.msra.mxu0 %v431
        %521 = vmatmul.bf16.gmra.mxu0 %v466
        %v522 = vpop.f32.mrf.mxu0
        %v523 = vadd.f32 %v436, %v522
        %v524 = vpop.f32.mrf.mxu0
        %v525 = vadd.f32 %v436, %v524
        %526 = vmatmul.bf16.gmra.mxu0 %v469
        %v527 = vpop.f32.mrf.mxu0
        %v528 = vadd.f32 %v436, %v527
        %v529 = vpop.f32.mrf.mxu0
        %v530 = vadd.f32 %v436, %v529
        %531 = vmatmul.bf16.gmra.mxu0 %v472
        %v532 = vpop.f32.mrf.mxu0
        %v533 = vadd.f32 %v436, %v532
        %v534 = vpop.f32.mrf.mxu0
        %v535 = vadd.f32 %v436, %v534
        %536 = vmatmul.bf16.gmra.mxu0 %v475
        %v537 = vpop.f32.mrf.mxu0
        %v538 = vadd.f32 %v436, %v537
        %v539 = vpop.f32.mrf.mxu0
        %v540 = vadd.f32 %v436, %v539
        %541 = vmatmul.bf16.gmra.mxu0 %v478
        %v542 = vpop.f32.mrf.mxu0
        %v543 = vadd.f32 %v436, %v542
        %v544 = vpop.f32.mrf.mxu0
        %v545 = vadd.f32 %v436, %v544
        %546 = vmatmul.bf16.gmra.mxu0 %v481
        %v547 = vpop.f32.mrf.mxu0
        %v548 = vadd.f32 %v436, %v547
        %v549 = vpop.f32.mrf.mxu0
        %v550 = vadd.f32 %v436, %v549
        %551 = vmatmul.bf16.gmra.mxu0 %v484
        %v552 = vpop.f32.mrf.mxu0
        %v553 = vadd.f32 %v436, %v552
        %v554 = vpop.f32.mrf.mxu0
        %v555 = vadd.f32 %v436, %v554
        %556 = vmatmul.bf16.gmra.mxu0 %v487
        %v557 = vpop.f32.mrf.mxu0
        %v558 = vadd.f32 %v436, %v557
        %v559 = vpop.f32.mrf.mxu0
        %v560 = vadd.f32 %v436, %v559
        %561 = vmatmul.bf16.gmra.mxu0 %v490
        %v562 = vpop.f32.mrf.mxu0
        %v563 = vadd.f32 %v436, %v562
        %v564 = vpop.f32.mrf.mxu0
        %v565 = vadd.f32 %v436, %v564
        %566 = vmatmul.bf16.gmra.mxu0 %v493
        %v567 = vpop.f32.mrf.mxu0
        %v568 = vadd.f32 %v436, %v567
        %v569 = vpop.f32.mrf.mxu0
        %v570 = vadd.f32 %v436, %v569
        %571 = vmatmul.bf16.gmra.mxu0 %v496
        %v572 = vpop.f32.mrf.mxu0
        %v573 = vadd.f32 %v436, %v572
        %v574 = vpop.f32.mrf.mxu0
        %v575 = vadd.f32 %v436, %v574
        %576 = vmatmul.bf16.gmra.mxu0 %v499
        %v577 = vpop.f32.mrf.mxu0
        %v578 = vadd.f32 %v436, %v577
        %v579 = vpop.f32.mrf.mxu0
        %v580 = vadd.f32 %v436, %v579
        %581 = vmatmul.bf16.gmra.mxu0 %v502
        %v582 = vpop.f32.mrf.mxu0
        %v583 = vadd.f32 %v436, %v582
        %v584 = vpop.f32.mrf.mxu0
        %v585 = vadd.f32 %v436, %v584
        %586 = vmatmul.bf16.gmra.mxu0 %v505
        %v587 = vpop.f32.mrf.mxu0
        %v588 = vadd.f32 %v436, %v587
        %v589 = vpop.f32.mrf.mxu0
        %v590 = vadd.f32 %v436, %v589
        %591 = vmatmul.bf16.gmra.mxu0 %v508
        %v592 = vpop.f32.mrf.mxu0
        %v593 = vadd.f32 %v436, %v592
        %v594 = vpop.f32.mrf.mxu0
        %v595 = vadd.f32 %v436, %v594
        %596 = vmatmul.bf16.gmra.mxu0 %v511
        %v597 = vpop.f32.mrf.mxu0
        %v598 = vadd.f32 %v436, %v597
        %v599 = vpop.f32.mrf.mxu0
        %v600 = vadd.f32 %v436, %v599
        %601 = vdwg.mxu0
        %602 = vmatpush.bf16.msra.mxu0 0
        %603 = vmatpush.bf16.msra.mxu0 0
        %604 = vmatpush.bf16.msra.mxu0 0
        %605 = vmatpush.bf16.msra.mxu0 0
        %606 = vmatpush.bf16.msra.mxu0 0
        %607 = vmatpush.bf16.msra.mxu0 0
        %608 = vmatpush.bf16.msra.mxu0 %v434
        %609 = vmatpush.bf16.msra.mxu0 %v432
        %610 = vmatmul.bf16.gmra.mxu0 %v466
        %v611 = vpop.f32.mrf.mxu0
        %v612 = vadd.f32 %v437, %v611
        %v613 = vpop.f32.mrf.mxu0
        %v614 = vadd.f32 %v437, %v613
        %615 = vmatmul.bf16.gmra.mxu0 %v469
        %v616 = vpop.f32.mrf.mxu0
        %v617 = vadd.f32 %v437, %v616
        %v618 = vpop.f32.mrf.mxu0
        %v619 = vadd.f32 %v437, %v618
        %620 = vmatmul.bf16.gmra.mxu0 %v472
        %v621 = vpop.f32.mrf.mxu0
        %v622 = vadd.f32 %v437, %v621
        %v623 = vpop.f32.mrf.mxu0
        %v624 = vadd.f32 %v437, %v623
        %625 = vmatmul.bf16.gmra.mxu0 %v475
        %v626 = vpop.f32.mrf.mxu0
        %v627 = vadd.f32 %v437, %v626
        %v628 = vpop.f32.mrf.mxu0
        %v629 = vadd.f32 %v437, %v628
        %630 = vmatmul.bf16.gmra.mxu0 %v478
        %v631 = vpop.f32.mrf.mxu0
        %v632 = vadd.f32 %v437, %v631
        %v633 = vpop.f32.mrf.mxu0
        %v634 = vadd.f32 %v437, %v633
        %635 = vmatmul.bf16.gmra.mxu0 %v481
        %v636 = vpop.f32.mrf.mxu0
        %v637 = vadd.f32 %v437, %v636
        %v638 = vpop.f32.mrf.mxu0
        %v639 = vadd.f32 %v437, %v638
        %640 = vmatmul.bf16.gmra.mxu0 %v484
        %v641 = vpop.f32.mrf.mxu0
        %v642 = vadd.f32 %v437, %v641
        %v643 = vpop.f32.mrf.mxu0
        %v644 = vadd.f32 %v437, %v643
        %645 = vmatmul.bf16.gmra.mxu0 %v487
        %v646 = vpop.f32.mrf.mxu0
        %v647 = vadd.f32 %v437, %v646
        %v648 = vpop.f32.mrf.mxu0
        %v649 = vadd.f32 %v437, %v648
        %650 = vmatmul.bf16.gmra.mxu0 %v490
        %v651 = vpop.f32.mrf.mxu0
        %v652 = vadd.f32 %v437, %v651
        %v653 = vpop.f32.mrf.mxu0
        %v654 = vadd.f32 %v437, %v653
        %655 = vmatmul.bf16.gmra.mxu0 %v493
        %v656 = vpop.f32.mrf.mxu0
        %v657 = vadd.f32 %v437, %v656
        %v658 = vpop.f32.mrf.mxu0
        %v659 = vadd.f32 %v437, %v658
        %660 = vmatmul.bf16.gmra.mxu0 %v496
        %v661 = vpop.f32.mrf.mxu0
        %v662 = vadd.f32 %v437, %v661
        %v663 = vpop.f32.mrf.mxu0
        %v664 = vadd.f32 %v437, %v663
        %665 = vmatmul.bf16.gmra.mxu0 %v499
        %v666 = vpop.f32.mrf.mxu0
        %v667 = vadd.f32 %v437, %v666
        %v668 = vpop.f32.mrf.mxu0
        %v669 = vadd.f32 %v437, %v668
        %670 = vmatmul.bf16.gmra.mxu0 %v502
        %v671 = vpop.f32.mrf.mxu0
        %v672 = vadd.f32 %v437, %v671
        %v673 = vpop.f32.mrf.mxu0
        %v674 = vadd.f32 %v437, %v673
        %675 = vmatmul.bf16.gmra.mxu0 %v505
        %v676 = vpop.f32.mrf.mxu0
        %v677 = vadd.f32 %v437, %v676
        %v678 = vpop.f32.mrf.mxu0
        %v679 = vadd.f32 %v437, %v678
        %680 = vmatmul.bf16.gmra.mxu0 %v508
        %v681 = vpop.f32.mrf.mxu0
        %v682 = vadd.f32 %v437, %v681
        %v683 = vpop.f32.mrf.mxu0
        %v684 = vadd.f32 %v437, %v683
        %685 = vmatmul.bf16.gmra.mxu0 %v511
        %v686 = vpop.f32.mrf.mxu0
        %v687 = vadd.f32 %v437, %v686
        %v688 = vpop.f32.mrf.mxu0
        %v689 = vadd.f32 %v437, %v688
        %690 = vdwg.mxu0
        %v691 = vmax.f32 %v523, %v612
        %692 = vmax.xlane.f32.xlu0 %v691
        %v693 = vpop.xlane.xlu0 %692
        %v694 = vmax.f32 %v525, %v614
        %695 = vmax.xlane.f32.xlu0 %v694
        %v696 = vpop.xlane.xlu0 %695
        %v697 = vmax.f32 %v528, %v617
        %698 = vmax.xlane.f32.xlu0 %v697
        %v699 = vpop.xlane.xlu0 %698
        %v700 = vmax.f32 %v530, %v619
        %701 = vmax.xlane.f32.xlu0 %v700
        %v702 = vpop.xlane.xlu0 %701
        %v703 = vmax.f32 %v533, %v622
        %704 = vmax.xlane.f32.xlu0 %v703
        %v705 = vpop.xlane.xlu0 %704
        %v706 = vmax.f32 %v535, %v624
        %707 = vmax.xlane.f32.xlu0 %v706
        %v708 = vpop.xlane.xlu0 %707
        %v709 = vmax.f32 %v538, %v627
        %710 = vmax.xlane.f32.xlu0 %v709
        %v711 = vpop.xlane.xlu0 %710
        %v712 = vmax.f32 %v540, %v629
        %713 = vmax.xlane.f32.xlu0 %v712
        %v714 = vpop.xlane.xlu0 %713
        %v715 = vmax.f32 %v543, %v632
        %716 = vmax.xlane.f32.xlu0 %v715
        %v717 = vpop.xlane.xlu0 %716
        %v718 = vmax.f32 %v545, %v634
        %719 = vmax.xlane.f32.xlu0 %v718
        %v720 = vpop.xlane.xlu0 %719
        %v721 = vmax.f32 %v548, %v637
        %722 = vmax.xlane.f32.xlu0 %v721
        %v723 = vpop.xlane.xlu0 %722
        %v724 = vmax.f32 %v550, %v639
        %725 = vmax.xlane.f32.xlu0 %v724
        %v726 = vpop.xlane.xlu0 %725
        %v727 = vmax.f32 %v553, %v642
        %728 = vmax.xlane.f32.xlu0 %v727
        %v729 = vpop.xlane.xlu0 %728
        %v730 = vmax.f32 %v555, %v644
        %731 = vmax.xlane.f32.xlu0 %v730
        %v732 = vpop.xlane.xlu0 %731
        %v733 = vmax.f32 %v558, %v647
        %734 = vmax.xlane.f32.xlu0 %v733
        %v735 = vpop.xlane.xlu0 %734
        %v736 = vmax.f32 %v560, %v649
        %737 = vmax.xlane.f32.xlu0 %v736
        %v738 = vpop.xlane.xlu0 %737
        %v739 = vmax.f32 %v563, %v652
        %740 = vmax.xlane.f32.xlu0 %v739
        %v741 = vpop.xlane.xlu0 %740
        %v742 = vmax.f32 %v565, %v654
        %743 = vmax.xlane.f32.xlu0 %v742
        %v744 = vpop.xlane.xlu0 %743
        %v745 = vmax.f32 %v568, %v657
        %746 = vmax.xlane.f32.xlu0 %v745
        %v747 = vpop.xlane.xlu0 %746
        %v748 = vmax.f32 %v570, %v659
        %749 = vmax.xlane.f32.xlu0 %v748
        %v750 = vpop.xlane.xlu0 %749
        %v751 = vmax.f32 %v573, %v662
        %752 = vmax.xlane.f32.xlu0 %v751
        %v753 = vpop.xlane.xlu0 %752
        %v754 = vmax.f32 %v575, %v664
        %755 = vmax.xlane.f32.xlu0 %v754
        %v756 = vpop.xlane.xlu0 %755
        %v757 = vmax.f32 %v578, %v667
        %758 = vmax.xlane.f32.xlu0 %v757
        %v759 = vpop.xlane.xlu0 %758
        %v760 = vmax.f32 %v580, %v669
        %761 = vmax.xlane.f32.xlu0 %v760
        %v762 = vpop.xlane.xlu0 %761
        %v763 = vmax.f32 %v583, %v672
        %764 = vmax.xlane.f32.xlu0 %v763
        %v765 = vpop.xlane.xlu0 %764
        %v766 = vmax.f32 %v585, %v674
        %767 = vmax.xlane.f32.xlu0 %v766
        %v768 = vpop.xlane.xlu0 %767
        %v769 = vmax.f32 %v588, %v677
        %770 = vmax.xlane.f32.xlu0 %v769
        %v771 = vpop.xlane.xlu0 %770
        %v772 = vmax.f32 %v590, %v679
        %773 = vmax.xlane.f32.xlu0 %v772
        %v774 = vpop.xlane.xlu0 %773
        %v775 = vmax.f32 %v593, %v682
        %776 = vmax.xlane.f32.xlu0 %v775
        %v777 = vpop.xlane.xlu0 %776
        %v778 = vmax.f32 %v595, %v684
        %779 = vmax.xlane.f32.xlu0 %v778
        %v780 = vpop.xlane.xlu0 %779
        %v781 = vmax.f32 %v598, %v687
        %782 = vmax.xlane.f32.xlu0 %v781
        %v783 = vpop.xlane.xlu0 %782
        %v784 = vmax.f32 %v600, %v689
        %785 = vmax.xlane.f32.xlu0 %v784
        %v786 = vpop.xlane.xlu0 %785
        %v787 = vlaneseq
        %v788 = vand.u32 %v787, 127
        %v789 = vadd.s32 %v788, 128
        %vm790 = vcmp.ge.f32.partialorder %v523, %v693
        %vm791 = vcmp.ge.f32.partialorder %v612, %v693
        %vm792 = vcmp.ge.f32.partialorder %v525, %v696
        %vm793 = vcmp.ge.f32.partialorder %v614, %v696
        %vm794 = vcmp.ge.f32.partialorder %v528, %v699
        %vm795 = vcmp.ge.f32.partialorder %v617, %v699
        %vm796 = vcmp.ge.f32.partialorder %v530, %v702
        %vm797 = vcmp.ge.f32.partialorder %v619, %v702
        %vm798 = vcmp.ge.f32.partialorder %v533, %v705
        %vm799 = vcmp.ge.f32.partialorder %v622, %v705
        %vm800 = vcmp.ge.f32.partialorder %v535, %v708
        %vm801 = vcmp.ge.f32.partialorder %v624, %v708
        %vm802 = vcmp.ge.f32.partialorder %v538, %v711
        %vm803 = vcmp.ge.f32.partialorder %v627, %v711
        %vm804 = vcmp.ge.f32.partialorder %v540, %v714
        %vm805 = vcmp.ge.f32.partialorder %v629, %v714
        %vm806 = vcmp.ge.f32.partialorder %v543, %v717
        %vm807 = vcmp.ge.f32.partialorder %v632, %v717
        %vm808 = vcmp.ge.f32.partialorder %v545, %v720
        %vm809 = vcmp.ge.f32.partialorder %v634, %v720
        %vm810 = vcmp.ge.f32.partialorder %v548, %v723
        %vm811 = vcmp.ge.f32.partialorder %v637, %v723
        %vm812 = vcmp.ge.f32.partialorder %v550, %v726
        %vm813 = vcmp.ge.f32.partialorder %v639, %v726
        %vm814 = vcmp.ge.f32.partialorder %v553, %v729
        %vm815 = vcmp.ge.f32.partialorder %v642, %v729
        %vm816 = vcmp.ge.f32.partialorder %v555, %v732
        %vm817 = vcmp.ge.f32.partialorder %v644, %v732
        %vm818 = vcmp.ge.f32.partialorder %v558, %v735
        %vm819 = vcmp.ge.f32.partialorder %v647, %v735
        %vm820 = vcmp.ge.f32.partialorder %v560, %v738
        %vm821 = vcmp.ge.f32.partialorder %v649, %v738
        %vm822 = vcmp.ge.f32.partialorder %v563, %v741
        %vm823 = vcmp.ge.f32.partialorder %v652, %v741
        %vm824 = vcmp.ge.f32.partialorder %v565, %v744
        %vm825 = vcmp.ge.f32.partialorder %v654, %v744
        %vm826 = vcmp.ge.f32.partialorder %v568, %v747
        %vm827 = vcmp.ge.f32.partialorder %v657, %v747
        %vm828 = vcmp.ge.f32.partialorder %v570, %v750
        %vm829 = vcmp.ge.f32.partialorder %v659, %v750
        %vm830 = vcmp.ge.f32.partialorder %v573, %v753
        %vm831 = vcmp.ge.f32.partialorder %v662, %v753
        %vm832 = vcmp.ge.f32.partialorder %v575, %v756
        %vm833 = vcmp.ge.f32.partialorder %v664, %v756
        %vm834 = vcmp.ge.f32.partialorder %v578, %v759
        %vm835 = vcmp.ge.f32.partialorder %v667, %v759
        %vm836 = vcmp.ge.f32.partialorder %v580, %v762
        %vm837 = vcmp.ge.f32.partialorder %v669, %v762
        %vm838 = vcmp.ge.f32.partialorder %v583, %v765
        %vm839 = vcmp.ge.f32.partialorder %v672, %v765
        %vm840 = vcmp.ge.f32.partialorder %v585, %v768
        %vm841 = vcmp.ge.f32.partialorder %v674, %v768
        %vm842 = vcmp.ge.f32.partialorder %v588, %v771
        %vm843 = vcmp.ge.f32.partialorder %v677, %v771
        %vm844 = vcmp.ge.f32.partialorder %v590, %v774
        %vm845 = vcmp.ge.f32.partialorder %v679, %v774
        %vm846 = vcmp.ge.f32.partialorder %v593, %v777
        %vm847 = vcmp.ge.f32.partialorder %v682, %v777
        %vm848 = vcmp.ge.f32.partialorder %v595, %v780
        %vm849 = vcmp.ge.f32.partialorder %v684, %v780
        %vm850 = vcmp.ge.f32.partialorder %v598, %v783
        %vm851 = vcmp.ge.f32.partialorder %v687, %v783
        %vm852 = vcmp.ge.f32.partialorder %v600, %v786
        %vm853 = vcmp.ge.f32.partialorder %v689, %v786
        %v854 = vsel %vm790, %v788, 256
        %v855 = vsel %vm791, %v789, 256
        %v856 = vsel %vm792, %v788, 256
        %v857 = vsel %vm793, %v789, 256
        %v858 = vsel %vm794, %v788, 256
        %v859 = vsel %vm795, %v789, 256
        %v860 = vsel %vm796, %v788, 256
        %v861 = vsel %vm797, %v789, 256
        %v862 = vsel %vm798, %v788, 256
        %v863 = vsel %vm799, %v789, 256
        %v864 = vsel %vm800, %v788, 256
        %v865 = vsel %vm801, %v789, 256
        %v866 = vsel %vm802, %v788, 256
        %v867 = vsel %vm803, %v789, 256
        %v868 = vsel %vm804, %v788, 256
        %v869 = vsel %vm805, %v789, 256
        %v870 = vsel %vm806, %v788, 256
        %v871 = vsel %vm807, %v789, 256
        %v872 = vsel %vm808, %v788, 256
        %v873 = vsel %vm809, %v789, 256
        %v874 = vsel %vm810, %v788, 256
        %v875 = vsel %vm811, %v789, 256
        %v876 = vsel %vm812, %v788, 256
        %v877 = vsel %vm813, %v789, 256
        %v878 = vsel %vm814, %v788, 256
        %v879 = vsel %vm815, %v789, 256
        %v880 = vsel %vm816, %v788, 256
        %v881 = vsel %vm817, %v789, 256
        %v882 = vsel %vm818, %v788, 256
        %v883 = vsel %vm819, %v789, 256
        %v884 = vsel %vm820, %v788, 256
        %v885 = vsel %vm821, %v789, 256
        %v886 = vsel %vm822, %v788, 256
        %v887 = vsel %vm823, %v789, 256
        %v888 = vsel %vm824, %v788, 256
        %v889 = vsel %vm825, %v789, 256
        %v890 = vsel %vm826, %v788, 256
        %v891 = vsel %vm827, %v789, 256
        %v892 = vsel %vm828, %v788, 256
        %v893 = vsel %vm829, %v789, 256
        %v894 = vsel %vm830, %v788, 256
        %v895 = vsel %vm831, %v789, 256
        %v896 = vsel %vm832, %v788, 256
        %v897 = vsel %vm833, %v789, 256
        %v898 = vsel %vm834, %v788, 256
        %v899 = vsel %vm835, %v789, 256
        %v900 = vsel %vm836, %v788, 256
        %v901 = vsel %vm837, %v789, 256
        %v902 = vsel %vm838, %v788, 256
        %v903 = vsel %vm839, %v789, 256
        %v904 = vsel %vm840, %v788, 256
        %v905 = vsel %vm841, %v789, 256
        %v906 = vsel %vm842, %v788, 256
        %v907 = vsel %vm843, %v789, 256
        %v908 = vsel %vm844, %v788, 256
        %v909 = vsel %vm845, %v789, 256
        %v910 = vsel %vm846, %v788, 256
        %v911 = vsel %vm847, %v789, 256
        %v912 = vsel %vm848, %v788, 256
        %v913 = vsel %vm849, %v789, 256
        %v914 = vsel %vm850, %v788, 256
        %v915 = vsel %vm851, %v789, 256
        %v916 = vsel %vm852, %v788, 256
        %v917 = vsel %vm853, %v789, 256
        %vm918 = vcmp.lt.s32.totalorder %v854, %v855
        %v919 = vsel %vm918, %v854, %v855
        %v920 = vand.u32 %v919, 65535
        %v921 = vshra.s32 %v919, 16
        %v922 = vcvt.s32.f32 %v920
        %v923 = vcvt.s32.f32 %v921
        %924 = vmin.xlane.f32.xlu0 %v923
        %v925 = vpop.xlane.xlu0 %924
        %vm926 = vcmp.eq.f32.partialorder %v923, %v925
        %v927 = vsel %vm926, %v922, inf
        %928 = vmin.xlane.f32.xlu0 %v927
        %v929 = vpop.xlane.xlu0 %928
        %v930 = vcvt.f32.s32 %v929
        %v931 = vcvt.f32.s32 %v925
        %v932 = vshll.u32 %v931, 16
        %v933 = vadd.s32 %v932, %v930
        %vm934 = vcmp.lt.s32.totalorder %v856, %v857
        %v935 = vsel %vm934, %v856, %v857
        %v936 = vand.u32 %v935, 65535
        %v937 = vshra.s32 %v935, 16
        %v938 = vcvt.s32.f32 %v936
        %v939 = vcvt.s32.f32 %v937
        %940 = vmin.xlane.f32.xlu0 %v939
        %v941 = vpop.xlane.xlu0 %940
        %vm942 = vcmp.eq.f32.partialorder %v939, %v941
        %v943 = vsel %vm942, %v938, inf
        %944 = vmin.xlane.f32.xlu0 %v943
        %v945 = vpop.xlane.xlu0 %944
        %v946 = vcvt.f32.s32 %v945
        %v947 = vcvt.f32.s32 %v941
        %v948 = vshll.u32 %v947, 16
        %v949 = vadd.s32 %v948, %v946
        %vm950 = vcmp.lt.s32.totalorder %v858, %v859
        %v951 = vsel %vm950, %v858, %v859
        %v952 = vand.u32 %v951, 65535
        %v953 = vshra.s32 %v951, 16
        %v954 = vcvt.s32.f32 %v952
        %v955 = vcvt.s32.f32 %v953
        %956 = vmin.xlane.f32.xlu0 %v955
        %v957 = vpop.xlane.xlu0 %956
        %vm958 = vcmp.eq.f32.partialorder %v955, %v957
        %v959 = vsel %vm958, %v954, inf
        %960 = vmin.xlane.f32.xlu0 %v959
        %v961 = vpop.xlane.xlu0 %960
        %v962 = vcvt.f32.s32 %v961
        %v963 = vcvt.f32.s32 %v957
        %v964 = vshll.u32 %v963, 16
        %v965 = vadd.s32 %v964, %v962
        %vm966 = vcmp.lt.s32.totalorder %v860, %v861
        %v967 = vsel %vm966, %v860, %v861
        %v968 = vand.u32 %v967, 65535
        %v969 = vshra.s32 %v967, 16
        %v970 = vcvt.s32.f32 %v968
        %v971 = vcvt.s32.f32 %v969
        %972 = vmin.xlane.f32.xlu0 %v971
        %v973 = vpop.xlane.xlu0 %972
        %vm974 = vcmp.eq.f32.partialorder %v971, %v973
        %v975 = vsel %vm974, %v970, inf
        %976 = vmin.xlane.f32.xlu0 %v975
        %v977 = vpop.xlane.xlu0 %976
        %v978 = vcvt.f32.s32 %v977
        %v979 = vcvt.f32.s32 %v973
        %v980 = vshll.u32 %v979, 16
        %v981 = vadd.s32 %v980, %v978
        %vm982 = vcmp.lt.s32.totalorder %v862, %v863
        %v983 = vsel %vm982, %v862, %v863
        %v984 = vand.u32 %v983, 65535
        %v985 = vshra.s32 %v983, 16
        %v986 = vcvt.s32.f32 %v984
        %v987 = vcvt.s32.f32 %v985
        %988 = vmin.xlane.f32.xlu0 %v987
        %v989 = vpop.xlane.xlu0 %988
        %vm990 = vcmp.eq.f32.partialorder %v987, %v989
        %v991 = vsel %vm990, %v986, inf
        %992 = vmin.xlane.f32.xlu0 %v991
        %v993 = vpop.xlane.xlu0 %992
        %v994 = vcvt.f32.s32 %v993
        %v995 = vcvt.f32.s32 %v989
        %v996 = vshll.u32 %v995, 16
        %v997 = vadd.s32 %v996, %v994
        %vm998 = vcmp.lt.s32.totalorder %v864, %v865
        %v999 = vsel %vm998, %v864, %v865
        %v1000 = vand.u32 %v999, 65535
        %v1001 = vshra.s32 %v999, 16
        %v1002 = vcvt.s32.f32 %v1000
        %v1003 = vcvt.s32.f32 %v1001
        %1004 = vmin.xlane.f32.xlu0 %v1003
        %v1005 = vpop.xlane.xlu0 %1004
        %vm1006 = vcmp.eq.f32.partialorder %v1003, %v1005
        %v1007 = vsel %vm1006, %v1002, inf
        %1008 = vmin.xlane.f32.xlu0 %v1007
        %v1009 = vpop.xlane.xlu0 %1008
        %v1010 = vcvt.f32.s32 %v1009
        %v1011 = vcvt.f32.s32 %v1005
        %v1012 = vshll.u32 %v1011, 16
        %v1013 = vadd.s32 %v1012, %v1010
        %vm1014 = vcmp.lt.s32.totalorder %v866, %v867
        %v1015 = vsel %vm1014, %v866, %v867
        %v1016 = vand.u32 %v1015, 65535
        %v1017 = vshra.s32 %v1015, 16
        %v1018 = vcvt.s32.f32 %v1016
        %v1019 = vcvt.s32.f32 %v1017
        %1020 = vmin.xlane.f32.xlu0 %v1019
        %v1021 = vpop.xlane.xlu0 %1020
        %vm1022 = vcmp.eq.f32.partialorder %v1019, %v1021
        %v1023 = vsel %vm1022, %v1018, inf
        %1024 = vmin.xlane.f32.xlu0 %v1023
        %v1025 = vpop.xlane.xlu0 %1024
        %v1026 = vcvt.f32.s32 %v1025
        %v1027 = vcvt.f32.s32 %v1021
        %v1028 = vshll.u32 %v1027, 16
        %v1029 = vadd.s32 %v1028, %v1026
        %vm1030 = vcmp.lt.s32.totalorder %v868, %v869
        %v1031 = vsel %vm1030, %v868, %v869
        %v1032 = vand.u32 %v1031, 65535
        %v1033 = vshra.s32 %v1031, 16
        %v1034 = vcvt.s32.f32 %v1032
        %v1035 = vcvt.s32.f32 %v1033
        %1036 = vmin.xlane.f32.xlu0 %v1035
        %v1037 = vpop.xlane.xlu0 %1036
        %vm1038 = vcmp.eq.f32.partialorder %v1035, %v1037
        %v1039 = vsel %vm1038, %v1034, inf
        %1040 = vmin.xlane.f32.xlu0 %v1039
        %v1041 = vpop.xlane.xlu0 %1040
        %v1042 = vcvt.f32.s32 %v1041
        %v1043 = vcvt.f32.s32 %v1037
        %v1044 = vshll.u32 %v1043, 16
        %v1045 = vadd.s32 %v1044, %v1042
        %vm1046 = vcmp.lt.s32.totalorder %v870, %v871
        %v1047 = vsel %vm1046, %v870, %v871
        %v1048 = vand.u32 %v1047, 65535
        %v1049 = vshra.s32 %v1047, 16
        %v1050 = vcvt.s32.f32 %v1048
        %v1051 = vcvt.s32.f32 %v1049
        %1052 = vmin.xlane.f32.xlu0 %v1051
        %v1053 = vpop.xlane.xlu0 %1052
        %vm1054 = vcmp.eq.f32.partialorder %v1051, %v1053
        %v1055 = vsel %vm1054, %v1050, inf
        %1056 = vmin.xlane.f32.xlu0 %v1055
        %v1057 = vpop.xlane.xlu0 %1056
        %v1058 = vcvt.f32.s32 %v1057
        %v1059 = vcvt.f32.s32 %v1053
        %v1060 = vshll.u32 %v1059, 16
        %v1061 = vadd.s32 %v1060, %v1058
        %vm1062 = vcmp.lt.s32.totalorder %v872, %v873
        %v1063 = vsel %vm1062, %v872, %v873
        %v1064 = vand.u32 %v1063, 65535
        %v1065 = vshra.s32 %v1063, 16
        %v1066 = vcvt.s32.f32 %v1064
        %v1067 = vcvt.s32.f32 %v1065
        %1068 = vmin.xlane.f32.xlu0 %v1067
        %v1069 = vpop.xlane.xlu0 %1068
        %vm1070 = vcmp.eq.f32.partialorder %v1067, %v1069
        %v1071 = vsel %vm1070, %v1066, inf
        %1072 = vmin.xlane.f32.xlu0 %v1071
        %v1073 = vpop.xlane.xlu0 %1072
        %v1074 = vcvt.f32.s32 %v1073
        %v1075 = vcvt.f32.s32 %v1069
        %v1076 = vshll.u32 %v1075, 16
        %v1077 = vadd.s32 %v1076, %v1074
        %vm1078 = vcmp.lt.s32.totalorder %v874, %v875
        %v1079 = vsel %vm1078, %v874, %v875
        %v1080 = vand.u32 %v1079, 65535
        %v1081 = vshra.s32 %v1079, 16
        %v1082 = vcvt.s32.f32 %v1080
        %v1083 = vcvt.s32.f32 %v1081
        %1084 = vmin.xlane.f32.xlu0 %v1083
        %v1085 = vpop.xlane.xlu0 %1084
        %vm1086 = vcmp.eq.f32.partialorder %v1083, %v1085
        %v1087 = vsel %vm1086, %v1082, inf
        %1088 = vmin.xlane.f32.xlu0 %v1087
        %v1089 = vpop.xlane.xlu0 %1088
        %v1090 = vcvt.f32.s32 %v1089
        %v1091 = vcvt.f32.s32 %v1085
        %v1092 = vshll.u32 %v1091, 16
        %v1093 = vadd.s32 %v1092, %v1090
        %vm1094 = vcmp.lt.s32.totalorder %v876, %v877
        %v1095 = vsel %vm1094, %v876, %v877
        %v1096 = vand.u32 %v1095, 65535
        %v1097 = vshra.s32 %v1095, 16
        %v1098 = vcvt.s32.f32 %v1096
        %v1099 = vcvt.s32.f32 %v1097
        %1100 = vmin.xlane.f32.xlu0 %v1099
        %v1101 = vpop.xlane.xlu0 %1100
        %vm1102 = vcmp.eq.f32.partialorder %v1099, %v1101
        %v1103 = vsel %vm1102, %v1098, inf
        %1104 = vmin.xlane.f32.xlu0 %v1103
        %v1105 = vpop.xlane.xlu0 %1104
        %v1106 = vcvt.f32.s32 %v1105
        %v1107 = vcvt.f32.s32 %v1101
        %v1108 = vshll.u32 %v1107, 16
        %v1109 = vadd.s32 %v1108, %v1106
        %vm1110 = vcmp.lt.s32.totalorder %v878, %v879
        %v1111 = vsel %vm1110, %v878, %v879
        %v1112 = vand.u32 %v1111, 65535
        %v1113 = vshra.s32 %v1111, 16
        %v1114 = vcvt.s32.f32 %v1112
        %v1115 = vcvt.s32.f32 %v1113
        %1116 = vmin.xlane.f32.xlu0 %v1115
        %v1117 = vpop.xlane.xlu0 %1116
        %vm1118 = vcmp.eq.f32.partialorder %v1115, %v1117
        %v1119 = vsel %vm1118, %v1114, inf
        %1120 = vmin.xlane.f32.xlu0 %v1119
        %v1121 = vpop.xlane.xlu0 %1120
        %v1122 = vcvt.f32.s32 %v1121
        %v1123 = vcvt.f32.s32 %v1117
        %v1124 = vshll.u32 %v1123, 16
        %v1125 = vadd.s32 %v1124, %v1122
        %vm1126 = vcmp.lt.s32.totalorder %v880, %v881
        %v1127 = vsel %vm1126, %v880, %v881
        %v1128 = vand.u32 %v1127, 65535
        %v1129 = vshra.s32 %v1127, 16
        %v1130 = vcvt.s32.f32 %v1128
        %v1131 = vcvt.s32.f32 %v1129
        %1132 = vmin.xlane.f32.xlu0 %v1131
        %v1133 = vpop.xlane.xlu0 %1132
        %vm1134 = vcmp.eq.f32.partialorder %v1131, %v1133
        %v1135 = vsel %vm1134, %v1130, inf
        %1136 = vmin.xlane.f32.xlu0 %v1135
        %v1137 = vpop.xlane.xlu0 %1136
        %v1138 = vcvt.f32.s32 %v1137
        %v1139 = vcvt.f32.s32 %v1133
        %v1140 = vshll.u32 %v1139, 16
        %v1141 = vadd.s32 %v1140, %v1138
        %vm1142 = vcmp.lt.s32.totalorder %v882, %v883
        %v1143 = vsel %vm1142, %v882, %v883
        %v1144 = vand.u32 %v1143, 65535
        %v1145 = vshra.s32 %v1143, 16
        %v1146 = vcvt.s32.f32 %v1144
        %v1147 = vcvt.s32.f32 %v1145
        %1148 = vmin.xlane.f32.xlu0 %v1147
        %v1149 = vpop.xlane.xlu0 %1148
        %vm1150 = vcmp.eq.f32.partialorder %v1147, %v1149
        %v1151 = vsel %vm1150, %v1146, inf
        %1152 = vmin.xlane.f32.xlu0 %v1151
        %v1153 = vpop.xlane.xlu0 %1152
        %v1154 = vcvt.f32.s32 %v1153
        %v1155 = vcvt.f32.s32 %v1149
        %v1156 = vshll.u32 %v1155, 16
        %v1157 = vadd.s32 %v1156, %v1154
        %vm1158 = vcmp.lt.s32.totalorder %v884, %v885
        %v1159 = vsel %vm1158, %v884, %v885
        %v1160 = vand.u32 %v1159, 65535
        %v1161 = vshra.s32 %v1159, 16
        %v1162 = vcvt.s32.f32 %v1160
        %v1163 = vcvt.s32.f32 %v1161
        %1164 = vmin.xlane.f32.xlu0 %v1163
        %v1165 = vpop.xlane.xlu0 %1164
        %vm1166 = vcmp.eq.f32.partialorder %v1163, %v1165
        %v1167 = vsel %vm1166, %v1162, inf
        %1168 = vmin.xlane.f32.xlu0 %v1167
        %v1169 = vpop.xlane.xlu0 %1168
        %v1170 = vcvt.f32.s32 %v1169
        %v1171 = vcvt.f32.s32 %v1165
        %v1172 = vshll.u32 %v1171, 16
        %v1173 = vadd.s32 %v1172, %v1170
        %vm1174 = vcmp.lt.s32.totalorder %v886, %v887
        %v1175 = vsel %vm1174, %v886, %v887
        %v1176 = vand.u32 %v1175, 65535
        %v1177 = vshra.s32 %v1175, 16
        %v1178 = vcvt.s32.f32 %v1176
        %v1179 = vcvt.s32.f32 %v1177
        %1180 = vmin.xlane.f32.xlu0 %v1179
        %v1181 = vpop.xlane.xlu0 %1180
        %vm1182 = vcmp.eq.f32.partialorder %v1179, %v1181
        %v1183 = vsel %vm1182, %v1178, inf
        %1184 = vmin.xlane.f32.xlu0 %v1183
        %v1185 = vpop.xlane.xlu0 %1184
        %v1186 = vcvt.f32.s32 %v1185
        %v1187 = vcvt.f32.s32 %v1181
        %v1188 = vshll.u32 %v1187, 16
        %v1189 = vadd.s32 %v1188, %v1186
        %vm1190 = vcmp.lt.s32.totalorder %v888, %v889
        %v1191 = vsel %vm1190, %v888, %v889
        %v1192 = vand.u32 %v1191, 65535
        %v1193 = vshra.s32 %v1191, 16
        %v1194 = vcvt.s32.f32 %v1192
        %v1195 = vcvt.s32.f32 %v1193
        %1196 = vmin.xlane.f32.xlu0 %v1195
        %v1197 = vpop.xlane.xlu0 %1196
        %vm1198 = vcmp.eq.f32.partialorder %v1195, %v1197
        %v1199 = vsel %vm1198, %v1194, inf
        %1200 = vmin.xlane.f32.xlu0 %v1199
        %v1201 = vpop.xlane.xlu0 %1200
        %v1202 = vcvt.f32.s32 %v1201
        %v1203 = vcvt.f32.s32 %v1197
        %v1204 = vshll.u32 %v1203, 16
        %v1205 = vadd.s32 %v1204, %v1202
        %vm1206 = vcmp.lt.s32.totalorder %v890, %v891
        %v1207 = vsel %vm1206, %v890, %v891
        %v1208 = vand.u32 %v1207, 65535
        %v1209 = vshra.s32 %v1207, 16
        %v1210 = vcvt.s32.f32 %v1208
        %v1211 = vcvt.s32.f32 %v1209
        %1212 = vmin.xlane.f32.xlu0 %v1211
        %v1213 = vpop.xlane.xlu0 %1212
        %vm1214 = vcmp.eq.f32.partialorder %v1211, %v1213
        %v1215 = vsel %vm1214, %v1210, inf
        %1216 = vmin.xlane.f32.xlu0 %v1215
        %v1217 = vpop.xlane.xlu0 %1216
        %v1218 = vcvt.f32.s32 %v1217
        %v1219 = vcvt.f32.s32 %v1213
        %v1220 = vshll.u32 %v1219, 16
        %v1221 = vadd.s32 %v1220, %v1218
        %vm1222 = vcmp.lt.s32.totalorder %v892, %v893
        %v1223 = vsel %vm1222, %v892, %v893
        %v1224 = vand.u32 %v1223, 65535
        %v1225 = vshra.s32 %v1223, 16
        %v1226 = vcvt.s32.f32 %v1224
        %v1227 = vcvt.s32.f32 %v1225
        %1228 = vmin.xlane.f32.xlu0 %v1227
        %v1229 = vpop.xlane.xlu0 %1228
        %vm1230 = vcmp.eq.f32.partialorder %v1227, %v1229
        %v1231 = vsel %vm1230, %v1226, inf
        %1232 = vmin.xlane.f32.xlu0 %v1231
        %v1233 = vpop.xlane.xlu0 %1232
        %v1234 = vcvt.f32.s32 %v1233
        %v1235 = vcvt.f32.s32 %v1229
        %v1236 = vshll.u32 %v1235, 16
        %v1237 = vadd.s32 %v1236, %v1234
        %vm1238 = vcmp.lt.s32.totalorder %v894, %v895
        %v1239 = vsel %vm1238, %v894, %v895
        %v1240 = vand.u32 %v1239, 65535
        %v1241 = vshra.s32 %v1239, 16
        %v1242 = vcvt.s32.f32 %v1240
        %v1243 = vcvt.s32.f32 %v1241
        %1244 = vmin.xlane.f32.xlu0 %v1243
        %v1245 = vpop.xlane.xlu0 %1244
        %vm1246 = vcmp.eq.f32.partialorder %v1243, %v1245
        %v1247 = vsel %vm1246, %v1242, inf
        %1248 = vmin.xlane.f32.xlu0 %v1247
        %v1249 = vpop.xlane.xlu0 %1248
        %v1250 = vcvt.f32.s32 %v1249
        %v1251 = vcvt.f32.s32 %v1245
        %v1252 = vshll.u32 %v1251, 16
        %v1253 = vadd.s32 %v1252, %v1250
        %vm1254 = vcmp.lt.s32.totalorder %v896, %v897
        %v1255 = vsel %vm1254, %v896, %v897
        %v1256 = vand.u32 %v1255, 65535
        %v1257 = vshra.s32 %v1255, 16
        %v1258 = vcvt.s32.f32 %v1256
        %v1259 = vcvt.s32.f32 %v1257
        %1260 = vmin.xlane.f32.xlu0 %v1259
        %v1261 = vpop.xlane.xlu0 %1260
        %vm1262 = vcmp.eq.f32.partialorder %v1259, %v1261
        %v1263 = vsel %vm1262, %v1258, inf
        %1264 = vmin.xlane.f32.xlu0 %v1263
        %v1265 = vpop.xlane.xlu0 %1264
        %v1266 = vcvt.f32.s32 %v1265
        %v1267 = vcvt.f32.s32 %v1261
        %v1268 = vshll.u32 %v1267, 16
        %v1269 = vadd.s32 %v1268, %v1266
        %vm1270 = vcmp.lt.s32.totalorder %v898, %v899
        %v1271 = vsel %vm1270, %v898, %v899
        %v1272 = vand.u32 %v1271, 65535
        %v1273 = vshra.s32 %v1271, 16
        %v1274 = vcvt.s32.f32 %v1272
        %v1275 = vcvt.s32.f32 %v1273
        %1276 = vmin.xlane.f32.xlu0 %v1275
        %v1277 = vpop.xlane.xlu0 %1276
        %vm1278 = vcmp.eq.f32.partialorder %v1275, %v1277
        %v1279 = vsel %vm1278, %v1274, inf
        %1280 = vmin.xlane.f32.xlu0 %v1279
        %v1281 = vpop.xlane.xlu0 %1280
        %v1282 = vcvt.f32.s32 %v1281
        %v1283 = vcvt.f32.s32 %v1277
        %v1284 = vshll.u32 %v1283, 16
        %v1285 = vadd.s32 %v1284, %v1282
        %vm1286 = vcmp.lt.s32.totalorder %v900, %v901
        %v1287 = vsel %vm1286, %v900, %v901
        %v1288 = vand.u32 %v1287, 65535
        %v1289 = vshra.s32 %v1287, 16
        %v1290 = vcvt.s32.f32 %v1288
        %v1291 = vcvt.s32.f32 %v1289
        %1292 = vmin.xlane.f32.xlu0 %v1291
        %v1293 = vpop.xlane.xlu0 %1292
        %vm1294 = vcmp.eq.f32.partialorder %v1291, %v1293
        %v1295 = vsel %vm1294, %v1290, inf
        %1296 = vmin.xlane.f32.xlu0 %v1295
        %v1297 = vpop.xlane.xlu0 %1296
        %v1298 = vcvt.f32.s32 %v1297
        %v1299 = vcvt.f32.s32 %v1293
        %v1300 = vshll.u32 %v1299, 16
        %v1301 = vadd.s32 %v1300, %v1298
        %vm1302 = vcmp.lt.s32.totalorder %v902, %v903
        %v1303 = vsel %vm1302, %v902, %v903
        %v1304 = vand.u32 %v1303, 65535
        %v1305 = vshra.s32 %v1303, 16
        %v1306 = vcvt.s32.f32 %v1304
        %v1307 = vcvt.s32.f32 %v1305
        %1308 = vmin.xlane.f32.xlu0 %v1307
        %v1309 = vpop.xlane.xlu0 %1308
        %vm1310 = vcmp.eq.f32.partialorder %v1307, %v1309
        %v1311 = vsel %vm1310, %v1306, inf
        %1312 = vmin.xlane.f32.xlu0 %v1311
        %v1313 = vpop.xlane.xlu0 %1312
        %v1314 = vcvt.f32.s32 %v1313
        %v1315 = vcvt.f32.s32 %v1309
        %v1316 = vshll.u32 %v1315, 16
        %v1317 = vadd.s32 %v1316, %v1314
        %vm1318 = vcmp.lt.s32.totalorder %v904, %v905
        %v1319 = vsel %vm1318, %v904, %v905
        %v1320 = vand.u32 %v1319, 65535
        %v1321 = vshra.s32 %v1319, 16
        %v1322 = vcvt.s32.f32 %v1320
        %v1323 = vcvt.s32.f32 %v1321
        %1324 = vmin.xlane.f32.xlu0 %v1323
        %v1325 = vpop.xlane.xlu0 %1324
        %vm1326 = vcmp.eq.f32.partialorder %v1323, %v1325
        %v1327 = vsel %vm1326, %v1322, inf
        %1328 = vmin.xlane.f32.xlu0 %v1327
        %v1329 = vpop.xlane.xlu0 %1328
        %v1330 = vcvt.f32.s32 %v1329
        %v1331 = vcvt.f32.s32 %v1325
        %v1332 = vshll.u32 %v1331, 16
        %v1333 = vadd.s32 %v1332, %v1330
        %vm1334 = vcmp.lt.s32.totalorder %v906, %v907
        %v1335 = vsel %vm1334, %v906, %v907
        %v1336 = vand.u32 %v1335, 65535
        %v1337 = vshra.s32 %v1335, 16
        %v1338 = vcvt.s32.f32 %v1336
        %v1339 = vcvt.s32.f32 %v1337
        %1340 = vmin.xlane.f32.xlu0 %v1339
        %v1341 = vpop.xlane.xlu0 %1340
        %vm1342 = vcmp.eq.f32.partialorder %v1339, %v1341
        %v1343 = vsel %vm1342, %v1338, inf
        %1344 = vmin.xlane.f32.xlu0 %v1343
        %v1345 = vpop.xlane.xlu0 %1344
        %v1346 = vcvt.f32.s32 %v1345
        %v1347 = vcvt.f32.s32 %v1341
        %v1348 = vshll.u32 %v1347, 16
        %v1349 = vadd.s32 %v1348, %v1346
        %vm1350 = vcmp.lt.s32.totalorder %v908, %v909
        %v1351 = vsel %vm1350, %v908, %v909
        %v1352 = vand.u32 %v1351, 65535
        %v1353 = vshra.s32 %v1351, 16
        %v1354 = vcvt.s32.f32 %v1352
        %v1355 = vcvt.s32.f32 %v1353
        %1356 = vmin.xlane.f32.xlu0 %v1355
        %v1357 = vpop.xlane.xlu0 %1356
        %vm1358 = vcmp.eq.f32.partialorder %v1355, %v1357
        %v1359 = vsel %vm1358, %v1354, inf
        %1360 = vmin.xlane.f32.xlu0 %v1359
        %v1361 = vpop.xlane.xlu0 %1360
        %v1362 = vcvt.f32.s32 %v1361
        %v1363 = vcvt.f32.s32 %v1357
        %v1364 = vshll.u32 %v1363, 16
        %v1365 = vadd.s32 %v1364, %v1362
        %vm1366 = vcmp.lt.s32.totalorder %v910, %v911
        %v1367 = vsel %vm1366, %v910, %v911
        %v1368 = vand.u32 %v1367, 65535
        %v1369 = vshra.s32 %v1367, 16
        %v1370 = vcvt.s32.f32 %v1368
        %v1371 = vcvt.s32.f32 %v1369
        %1372 = vmin.xlane.f32.xlu0 %v1371
        %v1373 = vpop.xlane.xlu0 %1372
        %vm1374 = vcmp.eq.f32.partialorder %v1371, %v1373
        %v1375 = vsel %vm1374, %v1370, inf
        %1376 = vmin.xlane.f32.xlu0 %v1375
        %v1377 = vpop.xlane.xlu0 %1376
        %v1378 = vcvt.f32.s32 %v1377
        %v1379 = vcvt.f32.s32 %v1373
        %v1380 = vshll.u32 %v1379, 16
        %v1381 = vadd.s32 %v1380, %v1378
        %vm1382 = vcmp.lt.s32.totalorder %v912, %v913
        %v1383 = vsel %vm1382, %v912, %v913
        %v1384 = vand.u32 %v1383, 65535
        %v1385 = vshra.s32 %v1383, 16
        %v1386 = vcvt.s32.f32 %v1384
        %v1387 = vcvt.s32.f32 %v1385
        %1388 = vmin.xlane.f32.xlu0 %v1387
        %v1389 = vpop.xlane.xlu0 %1388
        %vm1390 = vcmp.eq.f32.partialorder %v1387, %v1389
        %v1391 = vsel %vm1390, %v1386, inf
        %1392 = vmin.xlane.f32.xlu0 %v1391
        %v1393 = vpop.xlane.xlu0 %1392
        %v1394 = vcvt.f32.s32 %v1393
        %v1395 = vcvt.f32.s32 %v1389
        %v1396 = vshll.u32 %v1395, 16
        %v1397 = vadd.s32 %v1396, %v1394
        %vm1398 = vcmp.lt.s32.totalorder %v914, %v915
        %v1399 = vsel %vm1398, %v914, %v915
        %v1400 = vand.u32 %v1399, 65535
        %v1401 = vshra.s32 %v1399, 16
        %v1402 = vcvt.s32.f32 %v1400
        %v1403 = vcvt.s32.f32 %v1401
        %1404 = vmin.xlane.f32.xlu0 %v1403
        %v1405 = vpop.xlane.xlu0 %1404
        %vm1406 = vcmp.eq.f32.partialorder %v1403, %v1405
        %v1407 = vsel %vm1406, %v1402, inf
        %1408 = vmin.xlane.f32.xlu0 %v1407
        %v1409 = vpop.xlane.xlu0 %1408
        %v1410 = vcvt.f32.s32 %v1409
        %v1411 = vcvt.f32.s32 %v1405
        %v1412 = vshll.u32 %v1411, 16
        %v1413 = vadd.s32 %v1412, %v1410
        %vm1414 = vcmp.lt.s32.totalorder %v916, %v917
        %v1415 = vsel %vm1414, %v916, %v917
        %v1416 = vand.u32 %v1415, 65535
        %v1417 = vshra.s32 %v1415, 16
        %v1418 = vcvt.s32.f32 %v1416
        %v1419 = vcvt.s32.f32 %v1417
        %1420 = vmin.xlane.f32.xlu0 %v1419
        %v1421 = vpop.xlane.xlu0 %1420
        %vm1422 = vcmp.eq.f32.partialorder %v1419, %v1421
        %v1423 = vsel %vm1422, %v1418, inf
        %1424 = vmin.xlane.f32.xlu0 %v1423
        %v1425 = vpop.xlane.xlu0 %1424
        %v1426 = vcvt.f32.s32 %v1425
        %v1427 = vcvt.f32.s32 %v1421
        %v1428 = vshll.u32 %v1427, 16
        %v1429 = vadd.s32 %v1428, %v1426
        %vm1430 = vcmp.eq.s32.totalorder %v788, %v933
        %vm1431 = vcmp.eq.s32.totalorder %v789, %v933
        %vm1432 = vcmp.eq.s32.totalorder %v788, %v949
        %vm1433 = vcmp.eq.s32.totalorder %v789, %v949
        %vm1434 = vcmp.eq.s32.totalorder %v788, %v965
        %vm1435 = vcmp.eq.s32.totalorder %v789, %v965
        %vm1436 = vcmp.eq.s32.totalorder %v788, %v981
        %vm1437 = vcmp.eq.s32.totalorder %v789, %v981
        %vm1438 = vcmp.eq.s32.totalorder %v788, %v997
        %vm1439 = vcmp.eq.s32.totalorder %v789, %v997
        %vm1440 = vcmp.eq.s32.totalorder %v788, %v1013
        %vm1441 = vcmp.eq.s32.totalorder %v789, %v1013
        %vm1442 = vcmp.eq.s32.totalorder %v788, %v1029
        %vm1443 = vcmp.eq.s32.totalorder %v789, %v1029
        %vm1444 = vcmp.eq.s32.totalorder %v788, %v1045
        %vm1445 = vcmp.eq.s32.totalorder %v789, %v1045
        %vm1446 = vcmp.eq.s32.totalorder %v788, %v1061
        %vm1447 = vcmp.eq.s32.totalorder %v789, %v1061
        %vm1448 = vcmp.eq.s32.totalorder %v788, %v1077
        %vm1449 = vcmp.eq.s32.totalorder %v789, %v1077
        %vm1450 = vcmp.eq.s32.totalorder %v788, %v1093
        %vm1451 = vcmp.eq.s32.totalorder %v789, %v1093
        %vm1452 = vcmp.eq.s32.totalorder %v788, %v1109
        %vm1453 = vcmp.eq.s32.totalorder %v789, %v1109
        %vm1454 = vcmp.eq.s32.totalorder %v788, %v1125
        %vm1455 = vcmp.eq.s32.totalorder %v789, %v1125
        %vm1456 = vcmp.eq.s32.totalorder %v788, %v1141
        %vm1457 = vcmp.eq.s32.totalorder %v789, %v1141
        %vm1458 = vcmp.eq.s32.totalorder %v788, %v1157
        %vm1459 = vcmp.eq.s32.totalorder %v789, %v1157
        %vm1460 = vcmp.eq.s32.totalorder %v788, %v1173
        %vm1461 = vcmp.eq.s32.totalorder %v789, %v1173
        %vm1462 = vcmp.eq.s32.totalorder %v788, %v1189
        %vm1463 = vcmp.eq.s32.totalorder %v789, %v1189
        %vm1464 = vcmp.eq.s32.totalorder %v788, %v1205
        %vm1465 = vcmp.eq.s32.totalorder %v789, %v1205
        %vm1466 = vcmp.eq.s32.totalorder %v788, %v1221
        %vm1467 = vcmp.eq.s32.totalorder %v789, %v1221
        %vm1468 = vcmp.eq.s32.totalorder %v788, %v1237
        %vm1469 = vcmp.eq.s32.totalorder %v789, %v1237
        %vm1470 = vcmp.eq.s32.totalorder %v788, %v1253
        %vm1471 = vcmp.eq.s32.totalorder %v789, %v1253
        %vm1472 = vcmp.eq.s32.totalorder %v788, %v1269
        %vm1473 = vcmp.eq.s32.totalorder %v789, %v1269
        %vm1474 = vcmp.eq.s32.totalorder %v788, %v1285
        %vm1475 = vcmp.eq.s32.totalorder %v789, %v1285
        %vm1476 = vcmp.eq.s32.totalorder %v788, %v1301
        %vm1477 = vcmp.eq.s32.totalorder %v789, %v1301
        %vm1478 = vcmp.eq.s32.totalorder %v788, %v1317
        %vm1479 = vcmp.eq.s32.totalorder %v789, %v1317
        %vm1480 = vcmp.eq.s32.totalorder %v788, %v1333
        %vm1481 = vcmp.eq.s32.totalorder %v789, %v1333
        %vm1482 = vcmp.eq.s32.totalorder %v788, %v1349
        %vm1483 = vcmp.eq.s32.totalorder %v789, %v1349
        %vm1484 = vcmp.eq.s32.totalorder %v788, %v1365
        %vm1485 = vcmp.eq.s32.totalorder %v789, %v1365
        %vm1486 = vcmp.eq.s32.totalorder %v788, %v1381
        %vm1487 = vcmp.eq.s32.totalorder %v789, %v1381
        %vm1488 = vcmp.eq.s32.totalorder %v788, %v1397
        %vm1489 = vcmp.eq.s32.totalorder %v789, %v1397
        %vm1490 = vcmp.eq.s32.totalorder %v788, %v1413
        %vm1491 = vcmp.eq.s32.totalorder %v789, %v1413
        %vm1492 = vcmp.eq.s32.totalorder %v788, %v1429
        %vm1493 = vcmp.eq.s32.totalorder %v789, %v1429
        %v1494 = vsel %vm1430, 1, 0
        %v1495 = vsel %vm1431, 1, 0
        %v1496 = vsel %vm1432, 1, 0
        %v1497 = vsel %vm1433, 1, 0
        %v1498 = vsel %vm1434, 1, 0
        %v1499 = vsel %vm1435, 1, 0
        %v1500 = vsel %vm1436, 1, 0
        %v1501 = vsel %vm1437, 1, 0
        %v1502 = vsel %vm1438, 1, 0
        %v1503 = vsel %vm1439, 1, 0
        %v1504 = vsel %vm1440, 1, 0
        %v1505 = vsel %vm1441, 1, 0
        %v1506 = vsel %vm1442, 1, 0
        %v1507 = vsel %vm1443, 1, 0
        %v1508 = vsel %vm1444, 1, 0
        %v1509 = vsel %vm1445, 1, 0
        %v1510 = vsel %vm1446, 1, 0
        %v1511 = vsel %vm1447, 1, 0
        %v1512 = vsel %vm1448, 1, 0
        %v1513 = vsel %vm1449, 1, 0
        %v1514 = vsel %vm1450, 1, 0
        %v1515 = vsel %vm1451, 1, 0
        %v1516 = vsel %vm1452, 1, 0
        %v1517 = vsel %vm1453, 1, 0
        %v1518 = vsel %vm1454, 1, 0
        %v1519 = vsel %vm1455, 1, 0
        %v1520 = vsel %vm1456, 1, 0
        %v1521 = vsel %vm1457, 1, 0
        %v1522 = vsel %vm1458, 1, 0
        %v1523 = vsel %vm1459, 1, 0
        %v1524 = vsel %vm1460, 1, 0
        %v1525 = vsel %vm1461, 1, 0
        %v1526 = vsel %vm1462, 1, 0
        %v1527 = vsel %vm1463, 1, 0
        %v1528 = vsel %vm1464, 1, 0
        %v1529 = vsel %vm1465, 1, 0
        %v1530 = vsel %vm1466, 1, 0
        %v1531 = vsel %vm1467, 1, 0
        %v1532 = vsel %vm1468, 1, 0
        %v1533 = vsel %vm1469, 1, 0
        %v1534 = vsel %vm1470, 1, 0
        %v1535 = vsel %vm1471, 1, 0
        %v1536 = vsel %vm1472, 1, 0
        %v1537 = vsel %vm1473, 1, 0
        %v1538 = vsel %vm1474, 1, 0
        %v1539 = vsel %vm1475, 1, 0
        %v1540 = vsel %vm1476, 1, 0
        %v1541 = vsel %vm1477, 1, 0
        %v1542 = vsel %vm1478, 1, 0
        %v1543 = vsel %vm1479, 1, 0
        %v1544 = vsel %vm1480, 1, 0
        %v1545 = vsel %vm1481, 1, 0
        %v1546 = vsel %vm1482, 1, 0
        %v1547 = vsel %vm1483, 1, 0
        %v1548 = vsel %vm1484, 1, 0
        %v1549 = vsel %vm1485, 1, 0
        %v1550 = vsel %vm1486, 1, 0
        %v1551 = vsel %vm1487, 1, 0
        %v1552 = vsel %vm1488, 1, 0
        %v1553 = vsel %vm1489, 1, 0
        %v1554 = vsel %vm1490, 1, 0
        %v1555 = vsel %vm1491, 1, 0
        %v1556 = vsel %vm1492, 1, 0
        %v1557 = vsel %vm1493, 1, 0
        %v1558 = vcvt.s32.f32 %v1494
        %v1559 = vcvt.s32.f32 %v1495
        %v1560 = vcvt.s32.f32 %v1496
        %v1561 = vcvt.s32.f32 %v1497
        %v1562 = vcvt.s32.f32 %v1498
        %v1563 = vcvt.s32.f32 %v1499
        %v1564 = vcvt.s32.f32 %v1500
        %v1565 = vcvt.s32.f32 %v1501
        %v1566 = vcvt.s32.f32 %v1502
        %v1567 = vcvt.s32.f32 %v1503
        %v1568 = vcvt.s32.f32 %v1504
        %v1569 = vcvt.s32.f32 %v1505
        %v1570 = vcvt.s32.f32 %v1506
        %v1571 = vcvt.s32.f32 %v1507
        %v1572 = vcvt.s32.f32 %v1508
        %v1573 = vcvt.s32.f32 %v1509
        %v1574 = vcvt.s32.f32 %v1510
        %v1575 = vcvt.s32.f32 %v1511
        %v1576 = vcvt.s32.f32 %v1512
        %v1577 = vcvt.s32.f32 %v1513
        %v1578 = vcvt.s32.f32 %v1514
        %v1579 = vcvt.s32.f32 %v1515
        %v1580 = vcvt.s32.f32 %v1516
        %v1581 = vcvt.s32.f32 %v1517
        %v1582 = vcvt.s32.f32 %v1518
        %v1583 = vcvt.s32.f32 %v1519
        %v1584 = vcvt.s32.f32 %v1520
        %v1585 = vcvt.s32.f32 %v1521
        %v1586 = vcvt.s32.f32 %v1522
        %v1587 = vcvt.s32.f32 %v1523
        %v1588 = vcvt.s32.f32 %v1524
        %v1589 = vcvt.s32.f32 %v1525
        %v1590 = vcvt.s32.f32 %v1526
        %v1591 = vcvt.s32.f32 %v1527
        %v1592 = vcvt.s32.f32 %v1528
        %v1593 = vcvt.s32.f32 %v1529
        %v1594 = vcvt.s32.f32 %v1530
        %v1595 = vcvt.s32.f32 %v1531
        %v1596 = vcvt.s32.f32 %v1532
        %v1597 = vcvt.s32.f32 %v1533
        %v1598 = vcvt.s32.f32 %v1534
        %v1599 = vcvt.s32.f32 %v1535
        %v1600 = vcvt.s32.f32 %v1536
        %v1601 = vcvt.s32.f32 %v1537
        %v1602 = vcvt.s32.f32 %v1538
        %v1603 = vcvt.s32.f32 %v1539
        %v1604 = vcvt.s32.f32 %v1540
        %v1605 = vcvt.s32.f32 %v1541
        %v1606 = vcvt.s32.f32 %v1542
        %v1607 = vcvt.s32.f32 %v1543
        %v1608 = vcvt.s32.f32 %v1544
        %v1609 = vcvt.s32.f32 %v1545
        %v1610 = vcvt.s32.f32 %v1546
        %v1611 = vcvt.s32.f32 %v1547
        %v1612 = vcvt.s32.f32 %v1548
        %v1613 = vcvt.s32.f32 %v1549
        %v1614 = vcvt.s32.f32 %v1550
        %v1615 = vcvt.s32.f32 %v1551
        %v1616 = vcvt.s32.f32 %v1552
        %v1617 = vcvt.s32.f32 %v1553
        %v1618 = vcvt.s32.f32 %v1554
        %v1619 = vcvt.s32.f32 %v1555
        %v1620 = vcvt.s32.f32 %v1556
        %v1621 = vcvt.s32.f32 %v1557
        %1622 = vmatpush.xpose.msra.mxu0 %v1588
        %1623 = vmatpush.xpose.msra.mxu0 %v1586
        %1624 = vmatpush.xpose.msra.mxu0 %v1584
        %1625 = vmatpush.xpose.msra.mxu0 %v1582
        %1626 = vmatpush.xpose.msra.mxu0 %v1580
        %1627 = vmatpush.xpose.msra.mxu0 %v1578
        %1628 = vmatpush.xpose.msra.mxu0 %v1576
        %1629 = vmatpush.xpose.msra.mxu0 %v1574
        %1630 = vmatpush.xpose.msra.mxu0 %v1572
        %1631 = vmatpush.xpose.msra.mxu0 %v1570
        %1632 = vmatpush.xpose.msra.mxu0 %v1568
        %1633 = vmatpush.xpose.msra.mxu0 %v1566
        %1634 = vmatpush.xpose.msra.mxu0 %v1564
        %1635 = vmatpush.xpose.msra.mxu0 %v1562
        %1636 = vmatpush.xpose.msra.mxu0 %v1560
        %1637 = vmatpush.xpose.msra.mxu0 %v1558
        %1638 = vmatmul.f32.gmra.mxu0 %v297
        %v1639 = vpop.f32.mrf.mxu0
        %v1640 = vadd.f32 0.0, %v1639
        %1641 = vmatmul.f32.gmra.mxu0 %v299
        %v1642 = vpop.f32.mrf.mxu0
        %v1643 = vadd.f32 0.0, %v1642
        %1644 = vmatmul.f32.gmra.mxu0 %v301
        %v1645 = vpop.f32.mrf.mxu0
        %v1646 = vadd.f32 0.0, %v1645
        %1647 = vmatmul.f32.gmra.mxu0 %v303
        %v1648 = vpop.f32.mrf.mxu0
        %v1649 = vadd.f32 0.0, %v1648
        %1650 = vdwg.mxu0
        %1651 = vmatpush.xpose.msra.mxu0 %v1589
        %1652 = vmatpush.xpose.msra.mxu0 %v1587
        %1653 = vmatpush.xpose.msra.mxu0 %v1585
        %1654 = vmatpush.xpose.msra.mxu0 %v1583
        %1655 = vmatpush.xpose.msra.mxu0 %v1581
        %1656 = vmatpush.xpose.msra.mxu0 %v1579
        %1657 = vmatpush.xpose.msra.mxu0 %v1577
        %1658 = vmatpush.xpose.msra.mxu0 %v1575
        %1659 = vmatpush.xpose.msra.mxu0 %v1573
        %1660 = vmatpush.xpose.msra.mxu0 %v1571
        %1661 = vmatpush.xpose.msra.mxu0 %v1569
        %1662 = vmatpush.xpose.msra.mxu0 %v1567
        %1663 = vmatpush.xpose.msra.mxu0 %v1565
        %1664 = vmatpush.xpose.msra.mxu0 %v1563
        %1665 = vmatpush.xpose.msra.mxu0 %v1561
        %1666 = vmatpush.xpose.msra.mxu0 %v1559
        %1667 = vmatmul.f32.gmra.mxu0 %v298
        %v1668 = vpop.f32.mrf.mxu0
        %v1669 = vadd.f32 %v1640, %v1668
        %1670 = vmatmul.f32.gmra.mxu0 %v300
        %v1671 = vpop.f32.mrf.mxu0
        %v1672 = vadd.f32 %v1643, %v1671
        %1673 = vmatmul.f32.gmra.mxu0 %v302
        %v1674 = vpop.f32.mrf.mxu0
        %v1675 = vadd.f32 %v1646, %v1674
        %1676 = vmatmul.f32.gmra.mxu0 %v304
        %v1677 = vpop.f32.mrf.mxu0
        %v1678 = vadd.f32 %v1649, %v1677
        %1679 = vdwg.mxu0
        %1680 = vmatpush.xpose.msra.mxu0 %v1620
        %1681 = vmatpush.xpose.msra.mxu0 %v1618
        %1682 = vmatpush.xpose.msra.mxu0 %v1616
        %1683 = vmatpush.xpose.msra.mxu0 %v1614
        %1684 = vmatpush.xpose.msra.mxu0 %v1612
        %1685 = vmatpush.xpose.msra.mxu0 %v1610
        %1686 = vmatpush.xpose.msra.mxu0 %v1608
        %1687 = vmatpush.xpose.msra.mxu0 %v1606
        %1688 = vmatpush.xpose.msra.mxu0 %v1604
        %1689 = vmatpush.xpose.msra.mxu0 %v1602
        %1690 = vmatpush.xpose.msra.mxu0 %v1600
        %1691 = vmatpush.xpose.msra.mxu0 %v1598
        %1692 = vmatpush.xpose.msra.mxu0 %v1596
        %1693 = vmatpush.xpose.msra.mxu0 %v1594
        %1694 = vmatpush.xpose.msra.mxu0 %v1592
        %1695 = vmatpush.xpose.msra.mxu0 %v1590
        %1696 = vmatmul.f32.gmra.mxu0 %v297
        %v1697 = vpop.f32.mrf.mxu0
        %v1698 = vadd.f32 0.0, %v1697
        %1699 = vmatmul.f32.gmra.mxu0 %v299
        %v1700 = vpop.f32.mrf.mxu0
        %v1701 = vadd.f32 0.0, %v1700
        %1702 = vmatmul.f32.gmra.mxu0 %v301
        %v1703 = vpop.f32.mrf.mxu0
        %v1704 = vadd.f32 0.0, %v1703
        %1705 = vmatmul.f32.gmra.mxu0 %v303
        %v1706 = vpop.f32.mrf.mxu0
        %v1707 = vadd.f32 0.0, %v1706
        %1708 = vdwg.mxu0
        %1709 = vmatpush.xpose.msra.mxu0 %v1621
        %1710 = vmatpush.xpose.msra.mxu0 %v1619
        %1711 = vmatpush.xpose.msra.mxu0 %v1617
        %1712 = vmatpush.xpose.msra.mxu0 %v1615
        %1713 = vmatpush.xpose.msra.mxu0 %v1613
        %1714 = vmatpush.xpose.msra.mxu0 %v1611
        %1715 = vmatpush.xpose.msra.mxu0 %v1609
        %1716 = vmatpush.xpose.msra.mxu0 %v1607
        %1717 = vmatpush.xpose.msra.mxu0 %v1605
        %1718 = vmatpush.xpose.msra.mxu0 %v1603
        %1719 = vmatpush.xpose.msra.mxu0 %v1601
        %1720 = vmatpush.xpose.msra.mxu0 %v1599
        %1721 = vmatpush.xpose.msra.mxu0 %v1597
        %1722 = vmatpush.xpose.msra.mxu0 %v1595
        %1723 = vmatpush.xpose.msra.mxu0 %v1593
        %1724 = vmatpush.xpose.msra.mxu0 %v1591
        %1725 = vmatmul.f32.gmra.mxu0 %v298
        %v1726 = vpop.f32.mrf.mxu0
        %v1727 = vadd.f32 %v1698, %v1726
        %1728 = vmatmul.f32.gmra.mxu0 %v300
        %v1729 = vpop.f32.mrf.mxu0
        %v1730 = vadd.f32 %v1701, %v1729
        %1731 = vmatmul.f32.gmra.mxu0 %v302
        %v1732 = vpop.f32.mrf.mxu0
        %v1733 = vadd.f32 %v1704, %v1732
        %1734 = vmatmul.f32.gmra.mxu0 %v304
        %v1735 = vpop.f32.mrf.mxu0
        %v1736 = vadd.f32 %v1707, %v1735
        %1737 = vdwg.mxu0
        %v1739 = vperm.slane %v314, 0
        %v1740 = vperm.slane %v314, 1
        %v1743 = vmul.f32 %v1669, %v1739
        %v1744 = vmul.f32 %v1727, %v1740
        %v1745 = vmul.f32 %v1672, %v1739
        %v1746 = vmul.f32 %v1730, %v1740
        %v1747 = vmul.f32 %v1675, %v1739
        %v1748 = vmul.f32 %v1733, %v1740
        %v1749 = vmul.f32 %v1678, %v1739
        %v1750 = vmul.f32 %v1736, %v1740
        %1751 = vst [vmem:[%s276] sm:$0xff] %v1743
        %1752 = vst [vmem:[%s276 + $0x8] sm:$0xff] %v1744
        %1753 = vst [vmem:[%s276 + $0x10] sm:$0xff] %v1745
        %1754 = vst [vmem:[%s276 + $0x18] sm:$0xff] %v1746
        %1755 = vst [vmem:[%s276 + $0x20] sm:$0xff] %v1747
        %1756 = vst [vmem:[%s276 + $0x28] sm:$0xff] %v1748
        %1757 = vst [vmem:[%s276 + $0x30] sm:$0xff] %v1749
        %1758 = vst [vmem:[%s276 + $0x38] sm:$0xff] %v1750
      $region44: #{csa_forward.1} parent=35 // pred_fallthru
        _
      %s1759 = smul.u32 2, %s22
      %p1760 = scmp.lt.s32.totalorder %s21, 1
      %s1761 = scalar_select %p1760, %s21, 1
      %p1762 = scmp.lt.s32.totalorder %s1759, 1
      %s1763 = scalar_select %p1762, %s1759, 1
      %s1764 = smul.addr %s1761, 8
      %s1765 = sadd.s32 %s1763, %s1764
      %s1766 = smul.addr %s1765, 8
      %s1767 = scalar_lea.vmem %s5, %s1766
      // Predicated region
      $region45: #{csa_forward.1} parent=35 // pred_check
        %p1768 = pneg %p150
      $region46: #{csa_forward.1} parent=35 // pred_check_branch
        %1770 = sbr.rel (%p1768) target = $region48
      $region47: #{csa_forward.1} parent=35 // pred_region
        %s1771 = smul.u32 2, %s22
      $region48: #{csa_forward.1} parent=35 // pred_fallthru
        _
    $region36: #{csa_forward.1} parent=5 // pred_fallthru
      _
    %p1772 = scmp.le.s32.totalorder 2, %s12
    // Predicated region
    $region49: #{csa_forward.1} parent=5 // pred_check
      %p1773 = pneg %p1772
    $region50: #{csa_forward.1} parent=5 // pred_check_branch
      %1775 = sbr.rel (%p1773) target = $region52
    $region51: #{csa_forward.1} parent=5 // pred_region
      %s1776 = ssub.s32 %s12, 2
      // Predicated region
      $region53: #{csa_forward.1} parent=51 // pred_check
        %p1777 = pneg %p156
      $region54: #{csa_forward.1} parent=51 // pred_check_branch
        %1779 = sbr.rel (%p1777) target = $region56
      $region55: #{csa_forward.1} parent=51 // pred_region
        %s1780 = smul.u32 2, %s24
        %p1781 = scmp.lt.s32.totalorder %s23, 1
        %s1782 = scalar_select %p1781, %s23, 1
        %p1783 = scmp.lt.s32.totalorder %s1780, 1
        %s1784 = scalar_select %p1783, %s1780, 1
        %s1785 = smul.addr %s1782, 8
        %s1786 = sadd.s32 %s1784, %s1785
        %s1787 = smul.addr %s1786, 8
        %s1788 = scalar_lea.vmem %s5, %s1787
      $region56: #{csa_forward.1} parent=51 // pred_fallthru
        _
    $region52: #{csa_forward.1} parent=5 // pred_fallthru
      _
  $region6: #{csa_forward.1} parent=0 // loop_footer
    %s16 = sadd.s32 1, %s12
  $region7: #{csa_forward.1} parent=0 // loop_footer_branch
    %11 = sbr.rel target = $region3
  $region8: #{csa_forward.1} parent=0 // loop_exit
    _

</llo_original>
